<compile_context>
chip_gen: v7x
topology: tpu7x:2x2x1
jax: 0.10.0
libtpu: 0.0.40
codegen_flags: <defaults>
</compile_context>

<pallas_src>
import jax
import jax.numpy as jnp
from jax.experimental import pallas as pl
from jax.experimental.pallas import tpu as pltpu

LN_EPS = 1e-5


def _gate_mix_norm(i, y_e, h_ref, mask_ref, gamma_ref, beta_ref,
                   logits_s, hs_s, out_ref):
    """Gate-softmax mix with shared expert, residual, LayerNorm, masked store."""
    x32 = h_ref[...].astype(jnp.float32)               # residual / LN input
    mask = mask_ref[...].astype(jnp.float32)            # (TM, 1)
    logits = logits_s[...]                               # (TM, 8)
    l0 = logits[:, 2 * i:2 * i + 1]
    l1 = logits[:, 2 * i + 1:2 * i + 2]
    m = jnp.maximum(l0, l1)
    e0 = jnp.exp(l0 - m)
    e1 = jnp.exp(l1 - m)
    inv = 1.0 / (e0 + e1)
    y = (e0 * inv) * hs_s[...] + (e1 * inv) * y_e        # gated mix
    x = x32 + y                                           # residual (dropout == identity)
    # One-pass LayerNorm statistics: var = E[x^2] - mu^2 (clamped for safety).
    d_inv = 1.0 / x.shape[-1]
    mu = jnp.sum(x, axis=-1, keepdims=True) * d_inv
    ex2 = jnp.sum(x * x, axis=-1, keepdims=True) * d_inv
    var = jnp.maximum(ex2 - mu * mu, 0.0)
    xn = (x - mu) * jax.lax.rsqrt(var + LN_EPS)
    out = (xn * gamma_ref[i][None, :] + beta_ref[i][None, :]) * mask
    out_ref[...] = out.astype(out_ref.dtype)


def _moffn_kernel_resident(h_ref, mask_ref, w12_ref, w3_ref, wg_ref,
                           gamma_ref, beta_ref, o1_ref, o2_ref, o3_ref,
                           hbf_s, hs_s, logits_s):
    """grid = (token_tiles, 4 experts); all expert weights resident in VMEM."""
    e = pl.program_id(1)
    F = w3_ref.shape[1]

    @pl.when(e == 0)
    def _():
        # Cast h -> bf16 once per token tile; gate logits from f32 h.
        hbf_s[...] = h_ref[...].astype(jnp.bfloat16)
        logits_s[...] = jnp.dot(h_ref[...].astype(jnp.float32), wg_ref[...],
                                preferred_element_type=jnp.float32)

    # SwiGLU: fc_3( silu(fc_2(h)) * fc_1(h) ), W2||W1 fused into one matmul.
    ab = jnp.dot(hbf_s[...], w12_ref[e], preferred_element_type=jnp.float32)
    a = ab[:, :F]                                  # fc_2(h)
    b = ab[:, F:]                                  # fc_1(h)
    g = (a * jax.nn.sigmoid(a)) * b
    y_e = jnp.dot(g.astype(jnp.bfloat16), w3_ref[e],
                  preferred_element_type=jnp.float32)

    @pl.when(e == 0)
    def _():
        hs_s[...] = y_e                            # shared-expert output

    @pl.when(e == 1)
    def _():
        _gate_mix_norm(0, y_e, h_ref, mask_ref, gamma_ref, beta_ref,
                       logits_s, hs_s, o1_ref)

    @pl.when(e == 2)
    def _():
        _gate_mix_norm(1, y_e, h_ref, mask_ref, gamma_ref, beta_ref,
                       logits_s, hs_s, o2_ref)

    @pl.when(e == 3)
    def _():
        _gate_mix_norm(2, y_e, h_ref, mask_ref, gamma_ref, beta_ref,
                       logits_s, hs_s, o3_ref)


def _moffn_kernel_streamed(h_ref, mask_ref, w12_ref, w3_ref, wg_ref,
                           gamma_ref, beta_ref, o1_ref, o2_ref, o3_ref,
                           hbf_s, hs_s, acc_s, logits_s):
    """grid = (token_tiles, 4 experts, F chunks); weights streamed per chunk,
    y_e accumulated in f32 VMEM scratch across the F axis."""
    e = pl.program_id(1)
    f = pl.program_id(2)
    nf = pl.num_programs(2)
    tf = w3_ref.shape[0]

    @pl.when((e == 0) & (f == 0))
    def _():
        hbf_s[...] = h_ref[...].astype(jnp.bfloat16)
        logits_s[...] = jnp.dot(h_ref[...].astype(jnp.float32), wg_ref[...],
                                preferred_element_type=jnp.float32)

    @pl.when(f == 0)
    def _():
        acc_s[...] = jnp.zeros_like(acc_s)

    ab = jnp.dot(hbf_s[...], w12_ref[...], preferred_element_type=jnp.float32)
    a = ab[:, :tf]                                 # fc_2(h) chunk
    b = ab[:, tf:]                                 # fc_1(h) chunk
    g = (a * jax.nn.sigmoid(a)) * b
    acc_s[...] += jnp.dot(g.astype(jnp.bfloat16), w3_ref[...],
                          preferred_element_type=jnp.float32)

    last_f = f == nf - 1

    @pl.when(last_f & (e == 0))
    def _():
        hs_s[...] = acc_s[...]

    @pl.when(last_f & (e == 1))
    def _():
        _gate_mix_norm(0, acc_s[...], h_ref, mask_ref, gamma_ref, beta_ref,
                       logits_s, hs_s, o1_ref)

    @pl.when(last_f & (e == 2))
    def _():
        _gate_mix_norm(1, acc_s[...], h_ref, mask_ref, gamma_ref, beta_ref,
                       logits_s, hs_s, o2_ref)

    @pl.when(last_f & (e == 3))
    def _():
        _gate_mix_norm(2, acc_s[...], h_ref, mask_ref, gamma_ref, beta_ref,
                       logits_s, hs_s, o3_ref)


def _physical_vmem_bytes():
    try:
        info = pltpu.get_tpu_info()
        vmem = int(getattr(info, "vmem_capacity_bytes", 0) or 0)
    except Exception:
        vmem = 0
    return vmem if vmem > 0 else 128 * 1024 * 1024


def moffn_forward(h, mask, w1, w2, w3, wg, gamma, beta, *,
                  tm=None, tf=None, force_streamed=False, out_dtype=None,
                  compute_dtype=jnp.bfloat16):
    """h: (B, S, D), mask: (B, S, 1).  Returns (h1, h2, h3), each (B, S, D)."""
    B, S, D = h.shape
    N = B * S
    F = w1.shape[-1]
    out_dtype = h.dtype if out_dtype is None else out_dtype
    in_isz = jnp.dtype(h.dtype).itemsize
    out_isz = jnp.dtype(out_dtype).itemsize
    w_isz = jnp.dtype(compute_dtype).itemsize

    # Generation-aware VMEM budget (~85% of physical: v5e/v6e 128 MiB, v7x 64 MiB).
    vmem_limit = int(_physical_vmem_bytes() * 0.85)
    budget = int(vmem_limit * 0.9)   # headroom for compiler-internal scratch

    def per_tile_bytes(tm_, f_cols):
        # Double-buffered token blocks + scratch + f32 intermediates (ab, g, y_e).
        return (2 * tm_ * D * in_isz + 2 * tm_ * in_isz          # h, mask
                + 3 * 2 * tm_ * D * out_isz                       # 3 outputs
                + tm_ * D * 2 + tm_ * D * 4 + tm_ * 8 * 4         # hbf, hs, logits
                + tm_ * D * 4                                      # y_e / acc
                + tm_ * 2 * f_cols * 4 + tm_ * f_cols * 4)         # ab, g

    # Resident weights are conservatively counted double-buffered.
    w_resident = 2 * (4 * D * 2 * F + 4 * F * D) * w_isz

    if force_streamed:
        resident = False
    else:
        resident = w_resident + per_tile_bytes(tm if tm else 256, F) <= budget

    if tm is None:
        tm = 256 if resident else 512   # larger tile when weights are streamed
    tm = int(min(tm, pl.cdiv(N, 8) * 8))
    tm = max(8, (tm // 8) * 8)
    n_tiles = int(pl.cdiv(N, tm))
    n_pad = n_tiles * tm

    h2d = h.reshape(N, D)
    m2d = mask.reshape(N, 1)
    if n_pad != N:
        h2d = jnp.pad(h2d, ((0, n_pad - N), (0, 0)))
        m2d = jnp.pad(m2d, ((0, n_pad - N), (0, 0)))

    # All 6 gate rows packed as a single (D, 8) f32 operand (cols 6,7 zero).
    wg_t = jnp.zeros((D, 8), jnp.float32).at[:, :6].set(wg.T.astype(jnp.float32))
    gamma_f = gamma.astype(jnp.float32)
    beta_f = beta.astype(jnp.float32)

    tok_out = jax.ShapeDtypeStruct((n_pad, D), out_dtype)

    if resident:
        # Weights for all 4 experts loaded once (constant block index -> no
        # re-DMA across the grid).  W2||W1 fused to a single RHS stream.
        w12 = jnp.concatenate([w2, w1], axis=-1).astype(compute_dtype)  # (4,D,2F)
        w3c = w3.astype(compute_dtype)                                   # (4,F,D)
        grid = (n_tiles, 4)
        in_specs = [
            pl.BlockSpec((tm, D), lambda i, e: (i, 0)),
            pl.BlockSpec((tm, 1), lambda i, e: (i, 0)),
            pl.BlockSpec((4, D, 2 * F), lambda i, e: (0, 0, 0)),  # resident
            pl.BlockSpec((4, F, D), lambda i, e: (0, 0, 0)),      # resident
            pl.BlockSpec((D, 8), lambda i, e: (0, 0)),
            pl.BlockSpec((3, D), lambda i, e: (0, 0)),
            pl.BlockSpec((3, D), lambda i, e: (0, 0)),
        ]
        out_specs = [pl.BlockSpec((tm, D), lambda i, e: (i, 0))] * 3
        scratch = [pltpu.VMEM((tm, D), jnp.bfloat16),   # h cast once per tile
                   pltpu.VMEM((tm, D), jnp.float32),    # shared-expert output
                   pltpu.VMEM((tm, 8), jnp.float32)]    # gate logits
        semantics = ("parallel", "arbitrary")
        kernel = _moffn_kernel_resident
        F_used = F
        w_bytes = (w12.size + w3c.size) * w_isz          # read once
    else:
        # F-tiled streaming: pick tf so weight chunks + (tm, tf) f32
        # intermediates fit the VMEM budget.
        if tf is None:
            tf = min(1024, int(pl.cdiv(F, 128)) * 128)
            while tf > 128 and (per_tile_bytes(tm, tf)
                                + 2 * (D * 2 * tf + tf * D) * w_isz) > budget:
                tf -= 128
        tf = max(8, int(tf))
        kf = int(pl.cdiv(F, tf))
        F_pad = kf * tf
        pad_f = F_pad - F
        w1p = jnp.pad(w1, ((0, 0), (0, 0), (0, pad_f)))
        w2p = jnp.pad(w2, ((0, 0), (0, 0), (0, pad_f)))
        w3p = jnp.pad(w3, ((0, 0), (0, pad_f), (0, 0)))
        # (kf, 4, D, 2*tf): chunk f holds [W2[:, f*tf:(f+1)*tf] | W1[...]].
        w12 = jnp.concatenate([w2p.reshape(4, D, kf, tf),
                               w1p.reshape(4, D, kf, tf)], axis=-1)
        w12 = jnp.transpose(w12, (2, 0, 1, 3)).astype(compute_dtype)
        # (kf, 4, tf, D): matching W3 row chunks.
        w3c = jnp.transpose(w3p.reshape(4, kf, tf, D),
                            (1, 0, 2, 3)).astype(compute_dtype)
        grid = (n_tiles, 4, kf)
        in_specs = [
            pl.BlockSpec((tm, D), lambda i, e, f: (i, 0)),
            pl.BlockSpec((tm, 1), lambda i, e, f: (i, 0)),
            pl.BlockSpec((None, None, D, 2 * tf), lambda i, e, f: (f, e, 0, 0)),
            pl.BlockSpec((None, None, tf, D), lambda i, e, f: (f, e, 0, 0)),
            pl.BlockSpec((D, 8), lambda i, e, f: (0, 0)),
            pl.BlockSpec((3, D), lambda i, e, f: (0, 0)),
            pl.BlockSpec((3, D), lambda i, e, f: (0, 0)),
        ]
        out_specs = [pl.BlockSpec((tm, D), lambda i, e, f: (i, 0))] * 3
        scratch = [pltpu.VMEM((tm, D), jnp.bfloat16),
                   pltpu.VMEM((tm, D), jnp.float32),    # shared-expert output
                   pltpu.VMEM((tm, D), jnp.float32),    # y_e accumulator over F
                   pltpu.VMEM((tm, 8), jnp.float32)]
        semantics = ("parallel", "arbitrary", "arbitrary")
        kernel = _moffn_kernel_streamed
        F_used = F_pad
        w_bytes = (w12.size + w3c.size) * w_isz * n_tiles   # re-streamed per tile

    flops = int(24 * n_pad * D * F_used + 16 * n_pad * D)
    transcendentals = int(4 * n_pad * F_used + 9 * n_pad)
    bytes_accessed = int(h2d.size * in_isz + m2d.size * in_isz + w_bytes
                         + wg_t.size * 4 + (gamma_f.size + beta_f.size) * 4
                         + 3 * n_pad * D * out_isz)

    outs = pl.pallas_call(
        kernel,
        out_shape=(tok_out, tok_out, tok_out),
        grid_spec=pltpu.PrefetchScalarGridSpec(
            num_scalar_prefetch=0,
            grid=grid,
            in_specs=in_specs,
            out_specs=out_specs,
            scratch_shapes=scratch,
        ),
        compiler_params=pltpu.CompilerParams(
            dimension_semantics=semantics,
            vmem_limit_bytes=vmem_limit),
        cost_estimate=pl.CostEstimate(
            flops=flops, transcendentals=transcendentals,
            bytes_accessed=bytes_accessed),
    )(h2d, m2d, w12, w3c, wg_t, gamma_f, beta_f)

    return tuple(o[:N].reshape(B, S, D) for o in outs)


def moffn_reference(h, mask, w1, w2, w3, wg, gamma, beta):
    """Plain-JAX f32 reference mirroring the PyTorch forward (eval mode)."""
    def mlp(x, e):
        return (jax.nn.silu(x @ w2[e]) * (x @ w1[e])) @ w3[e]

    h_s = mlp(h, 0)
    outs = []
    for i in range(3):
        h_e = mlp(h, i + 1)
        logits = jnp.stack([h @ wg[2 * i], h @ wg[2 * i + 1]], axis=-1)
        g = jax.nn.softmax(logits, axis=-1)
        y = g[..., 0:1] * h_s + g[..., 1:2] * h_e
        x = h + y
        mu = jnp.mean(x, axis=-1, keepdims=True)
        var = jnp.mean((x - mu) ** 2, axis=-1, keepdims=True)
        xn = (x - mu) / jnp.sqrt(var + LN_EPS)
        outs.append((xn * gamma[i] + beta[i]) * mask)
    return tuple(outs)


if __name__ == "__main__":
    B, S, D, F = 2, 8, 32, 64  # batch, seq, d_embed, d_ffn (small test sizes)

    key = jax.random.PRNGKey(0)
    ks = jax.random.split(key, 8)

    # Deterministic parameter init (Linear-style scaling, stored as (in, out)).
    w1 = jax.random.uniform(ks[0], (4, D, F), jnp.float32, -1, 1) / jnp.sqrt(D)
    w2 = jax.random.uniform(ks[1], (4, D, F), jnp.float32, -1, 1) / jnp.sqrt(D)
    w3 = jax.random.uniform(ks[2], (4, F, D), jnp.float32, -1, 1) / jnp.sqrt(F)
    wg = jax.random.uniform(ks[3], (6, D), jnp.float32, -1, 1) / jnp.sqrt(D)
    gamma = jnp.ones((3, D), jnp.float32)   # LayerNorm default init
    beta = jnp.zeros((3, D), jnp.float32)

    h = jax.random.normal(ks[4], (B, S, D), jnp.float32)
    mask = (jax.random.uniform(ks[5], (B, S, 1)) > 0.2).astype(jnp.float32)

    refs = moffn_reference(h, mask, w1, w2, w3, wg, gamma, beta)

    # Path 1: resident-weight kernel (weights fit VMEM at these shapes).
    outs = moffn_forward(h, mask, w1, w2, w3, wg, gamma, beta)
    jax.block_until_ready(outs)
    for o, r in zip(outs, refs):
        assert jnp.allclose(o, r, atol=5e-2, rtol=5e-2), "resident path mismatch"

    # Path 2: F-tiled streaming kernel (exercised explicitly here; chosen
    # automatically when weights / intermediates exceed the VMEM budget).
    outs_s = moffn_forward(h, mask, w1, w2, w3, wg, gamma, beta,
                           force_streamed=True, tf=32)
    jax.block_until_ready(outs_s)
    for o, r in zip(outs_s, refs):
        assert jnp.allclose(o, r, atol=5e-2, rtol=5e-2), "streamed path mismatch"

    print("KERNEL_OK")
</pallas_src>

<mosaic_0001>
module attributes {stable_mosaic.version = 11 : i64} {
  func.func @_moffn_kernel_resident(%arg0: i32, %arg1: i32, %arg2: memref<16x32xf32, #tpu.memory_space<vmem>>, %arg3: memref<16x1xf32, #tpu.memory_space<vmem>>, %arg4: memref<4x32x128xbf16, #tpu.memory_space<vmem>>, %arg5: memref<4x64x32xbf16, #tpu.memory_space<vmem>>, %arg6: memref<32x8xf32, #tpu.memory_space<vmem>>, %arg7: memref<3x32xf32, #tpu.memory_space<vmem>>, %arg8: memref<3x32xf32, #tpu.memory_space<vmem>>, %arg9: memref<16x32xf32, #tpu.memory_space<vmem>>, %arg10: memref<16x32xf32, #tpu.memory_space<vmem>>, %arg11: memref<16x32xf32, #tpu.memory_space<vmem>>, %arg12: memref<16x32xbf16, #tpu.memory_space<vmem>>, %arg13: memref<16x32xf32, #tpu.memory_space<vmem>>, %arg14: memref<16x8xf32, #tpu.memory_space<vmem>>) attributes {dimension_semantics = [#tpu.dimension_semantics<parallel>, #tpu.dimension_semantics<arbitrary>], iteration_bounds = array<i64: 1, 4>, scalar_prefetch = 0 : i64, scratch_operands = 3 : i64, tpu.core_type = #tpu.core_type<tc>, window_params = [{transform_indices = @transform_0, window_bounds = array<i64: 16, 32>}, {transform_indices = @transform_1, window_bounds = array<i64: 16, 1>}, {pipeline_mode = #tpu.pipeline_mode<synchronous>, transform_indices = @transform_2, window_bounds = array<i64: 4, 32, 128>}, {pipeline_mode = #tpu.pipeline_mode<synchronous>, transform_indices = @transform_3, window_bounds = array<i64: 4, 64, 32>}, {pipeline_mode = #tpu.pipeline_mode<synchronous>, transform_indices = @transform_4, window_bounds = array<i64: 32, 8>}, {pipeline_mode = #tpu.pipeline_mode<synchronous>, transform_indices = @transform_5, window_bounds = array<i64: 3, 32>}, {pipeline_mode = #tpu.pipeline_mode<synchronous>, transform_indices = @transform_6, window_bounds = array<i64: 3, 32>}, {transform_indices = @transform_7, window_bounds = array<i64: 16, 32>}, {transform_indices = @transform_8, window_bounds = array<i64: 16, 32>}, {transform_indices = @transform_9, window_bounds = array<i64: 16, 32>}]} {
    %c0_i32 = arith.constant 0 : i32
    %0 = arith.cmpi eq, %arg1, %c0_i32 : i32
    %1 = arith.extui %0 : i1 to i32
    %c0_i32_0 = arith.constant 0 : i32
    %2 = arith.cmpi ne, %1, %c0_i32_0 : i32
    scf.if %2 {
      %c0_13 = arith.constant 0 : index
      %c0_14 = arith.constant 0 : index
      %34 = vector.load %arg2[%c0_13, %c0_14] : memref<16x32xf32, #tpu.memory_space<vmem>>, vector<16x32xf32>
      %35 = arith.truncf %34 : vector<16x32xf32> to vector<16x32xbf16>
      %c0_15 = arith.constant 0 : index
      %c0_16 = arith.constant 0 : index
      %36 = vector.load %arg12[%c0_15, %c0_16] : memref<16x32xbf16, #tpu.memory_space<vmem>>, vector<16x32xbf16>
      tpu.vector_store %arg12[%c0_15, %c0_16], %35 {strides = array<i32>} : memref<16x32xbf16, #tpu.memory_space<vmem>>, vector<16x32xbf16>,
      %c0_17 = arith.constant 0 : index
      %c0_18 = arith.constant 0 : index
      %37 = vector.load %arg2[%c0_17, %c0_18] : memref<16x32xf32, #tpu.memory_space<vmem>>, vector<16x32xf32>
      %c0_19 = arith.constant 0 : index
      %c0_20 = arith.constant 0 : index
      %38 = vector.load %arg6[%c0_19, %c0_20] : memref<32x8xf32, #tpu.memory_space<vmem>>, vector<32x8xf32>
      %cst_21 = arith.constant dense<0.000000e+00> : vector<16x8xf32>
      %39 = tpu.matmul %37, %38, %cst_21 {dimension_numbers = #tpu.dot_dimension_numbers<[1], [0], [0], [1], [0, 0, 1, 1], [], []>} : vector<16x32xf32>, vector<32x8xf32>, vector<16x8xf32> -> vector<16x8xf32>
      %c0_22 = arith.constant 0 : index
      %c0_23 = arith.constant 0 : index
      %40 = vector.load %arg14[%c0_22, %c0_23] : memref<16x8xf32, #tpu.memory_space<vmem>>, vector<16x8xf32>
      tpu.vector_store %arg14[%c0_22, %c0_23], %39 {strides = array<i32>} : memref<16x8xf32, #tpu.memory_space<vmem>>, vector<16x8xf32>,
    } else {
    }
    %c0 = arith.constant 0 : index
    %c0_1 = arith.constant 0 : index
    %3 = vector.load %arg12[%c0, %c0_1] : memref<16x32xbf16, #tpu.memory_space<vmem>>, vector<16x32xbf16>
    %4 = arith.index_cast %arg1 : i32 to index
    %c0_2 = arith.constant 0 : index
    %c0_3 = arith.constant 0 : index
    %5 = vector.load %arg4[%4, %c0_2, %c0_3] : memref<4x32x128xbf16, #tpu.memory_space<vmem>>, vector<1x32x128xbf16>
    %6 = vector.shape_cast %5 : vector<1x32x128xbf16> to vector<32x128xbf16>
    %cst = arith.constant dense<0.000000e+00> : vector<16x128xf32>
    %7 = tpu.matmul %3, %6, %cst {dimension_numbers = #tpu.dot_dimension_numbers<[1], [0], [0], [1], [0, 0, 1, 1], [], []>} : vector<16x32xbf16>, vector<32x128xbf16>, vector<16x128xf32> -> vector<16x128xf32>
    %8 = vector.extract_strided_slice %7 {offsets = [0, 0], sizes = [16, 64], strides = [1, 1]} : vector<16x128xf32> to vector<16x64xf32>
    %9 = vector.extract_strided_slice %7 {offsets = [0, 64], sizes = [16, 64], strides = [1, 1]} : vector<16x128xf32> to vector<16x64xf32>
    %10 = arith.negf %8 : vector<16x64xf32>
    %11 = math.exp %10 : vector<16x64xf32>
    %cst_4 = arith.constant 1.000000e+00 : f32
    %12 = vector.broadcast %cst_4 : f32 to vector<16x64xf32>
    %13 = arith.addf %12, %11 : vector<16x64xf32>
    %14 = arith.divf %12, %13 : vector<16x64xf32>
    %15 = arith.mulf %8, %14 : vector<16x64xf32>
    %16 = arith.mulf %15, %9 : vector<16x64xf32>
    %17 = arith.truncf %16 : vector<16x64xf32> to vector<16x64xbf16>
    %18 = arith.index_cast %arg1 : i32 to index
    %c0_5 = arith.constant 0 : index
    %c0_6 = arith.constant 0 : index
    %19 = vector.load %arg5[%18, %c0_5, %c0_6] : memref<4x64x32xbf16, #tpu.memory_space<vmem>>, vector<1x64x32xbf16>
    %20 = vector.shape_cast %19 : vector<1x64x32xbf16> to vector<64x32xbf16>
    %cst_7 = arith.constant dense<0.000000e+00> : vector<16x32xf32>
    %21 = tpu.matmul %17, %20, %cst_7 {dimension_numbers = #tpu.dot_dimension_numbers<[1], [0], [0], [1], [0, 0, 1, 1], [], []>} : vector<16x64xbf16>, vector<64x32xbf16>, vector<16x32xf32> -> vector<16x32xf32>
    %c0_i32_8 = arith.constant 0 : i32
    %22 = arith.cmpi eq, %arg1, %c0_i32_8 : i32
    %23 = arith.extui %22 : i1 to i32
    %c0_i32_9 = arith.constant 0 : i32
    %24 = arith.cmpi ne, %23, %c0_i32_9 : i32
    scf.if %24 {
      %c0_13 = arith.constant 0 : index
      %c0_14 = arith.constant 0 : index
      %34 = vector.load %arg13[%c0_13, %c0_14] : memref<16x32xf32, #tpu.memory_space<vmem>>, vector<16x32xf32>
      tpu.vector_store %arg13[%c0_13, %c0_14], %21 {strides = array<i32>} : memref<16x32xf32, #tpu.memory_space<vmem>>, vector<16x32xf32>,
    } else {
    }
    %c1_i32 = arith.constant 1 : i32
    %25 = arith.cmpi eq, %arg1, %c1_i32 : i32
    %26 = arith.extui %25 : i1 to i32
    %c0_i32_10 = arith.constant 0 : i32
    %27 = arith.cmpi ne, %26, %c0_i32_10 : i32
    scf.if %27 {
      %c0_13 = arith.constant 0 : index
      %c0_14 = arith.constant 0 : index
      %34 = vector.load %arg2[%c0_13, %c0_14] : memref<16x32xf32, #tpu.memory_space<vmem>>, vector<16x32xf32>
      %c0_15 = arith.constant 0 : index
      %c0_16 = arith.constant 0 : index
      %35 = vector.load %arg3[%c0_15, %c0_16] : memref<16x1xf32, #tpu.memory_space<vmem>>, vector<16x1xf32>
      %c0_17 = arith.constant 0 : index
      %c0_18 = arith.constant 0 : index
      %36 = vector.load %arg14[%c0_17, %c0_18] : memref<16x8xf32, #tpu.memory_space<vmem>>, vector<16x8xf32>
      %37 = vector.extract_strided_slice %36 {offsets = [0, 0], sizes = [16, 1], strides = [1, 1]} : vector<16x8xf32> to vector<16x1xf32>
      %38 = vector.extract_strided_slice %36 {offsets = [0, 1], sizes = [16, 1], strides = [1, 1]} : vector<16x8xf32> to vector<16x1xf32>
      %39 = arith.maximumf %37, %38 : vector<16x1xf32>
      %40 = arith.subf %37, %39 : vector<16x1xf32>
      %41 = math.exp %40 : vector<16x1xf32>
      %42 = arith.subf %38, %39 : vector<16x1xf32>
      %43 = math.exp %42 : vector<16x1xf32>
      %44 = arith.addf %41, %43 : vector<16x1xf32>
      %cst_19 = arith.constant 1.000000e+00 : f32
      %45 = vector.broadcast %cst_19 : f32 to vector<16x1xf32>
      %46 = arith.divf %45, %44 : vector<16x1xf32>
      %47 = arith.mulf %41, %46 : vector<16x1xf32>
      %c0_20 = arith.constant 0 : index
      %c0_21 = arith.constant 0 : index
      %48 = vector.load %arg13[%c0_20, %c0_21] : memref<16x32xf32, #tpu.memory_space<vmem>>, vector<16x32xf32>
      %49 = vector.broadcast %47 : vector<16x1xf32> to vector<16x32xf32>
      %50 = arith.mulf %49, %48 : vector<16x32xf32>
      %51 = arith.mulf %43, %46 : vector<16x1xf32>
      %52 = vector.broadcast %51 : vector<16x1xf32> to vector<16x32xf32>
      %53 = arith.mulf %52, %21 : vector<16x32xf32>
      %54 = arith.addf %50, %53 : vector<16x32xf32>
      %55 = arith.addf %34, %54 : vector<16x32xf32>
      %cst_22 = arith.constant dense<0.000000e+00> : vector<16xf32>
      %56 = vector.multi_reduction <add>, %55, %cst_22 [1] : vector<16x32xf32> to vector<16xf32>
      %57 = vector.shape_cast %56 : vector<16xf32> to vector<16x1xf32>
      %cst_23 = arith.constant 3.125000e-02 : f32
      %58 = vector.broadcast %cst_23 : f32 to vector<16x1xf32>
      %59 = arith.mulf %57, %58 : vector<16x1xf32>
      %60 = arith.mulf %55, %55 : vector<16x32xf32>
      %cst_24 = arith.constant dense<0.000000e+00> : vector<16xf32>
      %61 = vector.multi_reduction <add>, %60, %cst_24 [1] : vector<16x32xf32> to vector<16xf32>
      %62 = vector.shape_cast %61 : vector<16xf32> to vector<16x1xf32>
      %cst_25 = arith.constant 3.125000e-02 : f32
      %63 = vector.broadcast %cst_25 : f32 to vector<16x1xf32>
      %64 = arith.mulf %62, %63 : vector<16x1xf32>
      %65 = arith.mulf %59, %59 : vector<16x1xf32>
      %66 = arith.subf %64, %65 : vector<16x1xf32>
      %cst_26 = arith.constant 0.000000e+00 : f32
      %67 = vector.broadcast %cst_26 : f32 to vector<16x1xf32>
      %68 = arith.maximumf %66, %67 : vector<16x1xf32>
      %69 = vector.broadcast %59 : vector<16x1xf32> to vector<16x32xf32>
      %70 = arith.subf %55, %69 : vector<16x32xf32>
      %cst_27 = arith.constant 9.99999974E-6 : f32
      %71 = vector.broadcast %cst_27 : f32 to vector<16x1xf32>
      %72 = arith.addf %68, %71 : vector<16x1xf32>
      %73 = math.rsqrt %72 : vector<16x1xf32>
      %74 = vector.broadcast %73 : vector<16x1xf32> to vector<16x32xf32>
      %75 = arith.mulf %70, %74 : vector<16x32xf32>
      %c0_28 = arith.constant 0 : index
      %c0_29 = arith.constant 0 : index
      %76 = vector.load %arg7[%c0_28, %c0_29] : memref<3x32xf32, #tpu.memory_space<vmem>>, vector<1x32xf32>
      %77 = vector.shape_cast %76 : vector<1x32xf32> to vector<32xf32>
      %78 = vector.shape_cast %77 : vector<32xf32> to vector<1x32xf32>
      %79 = vector.broadcast %78 : vector<1x32xf32> to vector<16x32xf32>
      %80 = arith.mulf %75, %79 : vector<16x32xf32>
      %c0_30 = arith.constant 0 : index
      %c0_31 = arith.constant 0 : index
      %81 = vector.load %arg8[%c0_30, %c0_31] : memref<3x32xf32, #tpu.memory_space<vmem>>, vector<1x32xf32>
      %82 = vector.shape_cast %81 : vector<1x32xf32> to vector<32xf32>
      %83 = vector.shape_cast %82 : vector<32xf32> to vector<1x32xf32>
      %84 = vector.broadcast %83 : vector<1x32xf32> to vector<16x32xf32>
      %85 = arith.addf %80, %84 : vector<16x32xf32>
      %86 = vector.broadcast %35 : vector<16x1xf32> to vector<16x32xf32>
      %87 = arith.mulf %85, %86 : vector<16x32xf32>
      %c0_32 = arith.constant 0 : index
      %c0_33 = arith.constant 0 : index
      %88 = vector.load %arg9[%c0_32, %c0_33] : memref<16x32xf32, #tpu.memory_space<vmem>>, vector<16x32xf32>
      tpu.vector_store %arg9[%c0_32, %c0_33], %87 {strides = array<i32>} : memref<16x32xf32, #tpu.memory_space<vmem>>, vector<16x32xf32>,
    } else {
    }
    %c2_i32 = arith.constant 2 : i32
    %28 = arith.cmpi eq, %arg1, %c2_i32 : i32
    %29 = arith.extui %28 : i1 to i32
    %c0_i32_11 = arith.constant 0 : i32
    %30 = arith.cmpi ne, %29, %c0_i32_11 : i32
    scf.if %30 {
      %c0_13 = arith.constant 0 : index
      %c0_14 = arith.constant 0 : index
      %34 = vector.load %arg2[%c0_13, %c0_14] : memref<16x32xf32, #tpu.memory_space<vmem>>, vector<16x32xf32>
      %c0_15 = arith.constant 0 : index
      %c0_16 = arith.constant 0 : index
      %35 = vector.load %arg3[%c0_15, %c0_16] : memref<16x1xf32, #tpu.memory_space<vmem>>, vector<16x1xf32>
      %c0_17 = arith.constant 0 : index
      %c0_18 = arith.constant 0 : index
      %36 = vector.load %arg14[%c0_17, %c0_18] : memref<16x8xf32, #tpu.memory_space<vmem>>, vector<16x8xf32>
      %37 = vector.extract_strided_slice %36 {offsets = [0, 2], sizes = [16, 1], strides = [1, 1]} : vector<16x8xf32> to vector<16x1xf32>
      %38 = vector.extract_strided_slice %36 {offsets = [0, 3], sizes = [16, 1], strides = [1, 1]} : vector<16x8xf32> to vector<16x1xf32>
      %39 = arith.maximumf %37, %38 : vector<16x1xf32>
      %40 = arith.subf %37, %39 : vector<16x1xf32>
      %41 = math.exp %40 : vector<16x1xf32>
      %42 = arith.subf %38, %39 : vector<16x1xf32>
      %43 = math.exp %42 : vector<16x1xf32>
      %44 = arith.addf %41, %43 : vector<16x1xf32>
      %cst_19 = arith.constant 1.000000e+00 : f32
      %45 = vector.broadcast %cst_19 : f32 to vector<16x1xf32>
      %46 = arith.divf %45, %44 : vector<16x1xf32>
      %47 = arith.mulf %41, %46 : vector<16x1xf32>
      %c0_20 = arith.constant 0 : index
      %c0_21 = arith.constant 0 : index
      %48 = vector.load %arg13[%c0_20, %c0_21] : memref<16x32xf32, #tpu.memory_space<vmem>>, vector<16x32xf32>
      %49 = vector.broadcast %47 : vector<16x1xf32> to vector<16x32xf32>
      %50 = arith.mulf %49, %48 : vector<16x32xf32>
      %51 = arith.mulf %43, %46 : vector<16x1xf32>
      %52 = vector.broadcast %51 : vector<16x1xf32> to vector<16x32xf32>
      %53 = arith.mulf %52, %21 : vector<16x32xf32>
      %54 = arith.addf %50, %53 : vector<16x32xf32>
      %55 = arith.addf %34, %54 : vector<16x32xf32>
      %cst_22 = arith.constant dense<0.000000e+00> : vector<16xf32>
      %56 = vector.multi_reduction <add>, %55, %cst_22 [1] : vector<16x32xf32> to vector<16xf32>
      %57 = vector.shape_cast %56 : vector<16xf32> to vector<16x1xf32>
      %cst_23 = arith.constant 3.125000e-02 : f32
      %58 = vector.broadcast %cst_23 : f32 to vector<16x1xf32>
      %59 = arith.mulf %57, %58 : vector<16x1xf32>
      %60 = arith.mulf %55, %55 : vector<16x32xf32>
      %cst_24 = arith.constant dense<0.000000e+00> : vector<16xf32>
      %61 = vector.multi_reduction <add>, %60, %cst_24 [1] : vector<16x32xf32> to vector<16xf32>
      %62 = vector.shape_cast %61 : vector<16xf32> to vector<16x1xf32>
      %cst_25 = arith.constant 3.125000e-02 : f32
      %63 = vector.broadcast %cst_25 : f32 to vector<16x1xf32>
      %64 = arith.mulf %62, %63 : vector<16x1xf32>
      %65 = arith.mulf %59, %59 : vector<16x1xf32>
      %66 = arith.subf %64, %65 : vector<16x1xf32>
      %cst_26 = arith.constant 0.000000e+00 : f32
      %67 = vector.broadcast %cst_26 : f32 to vector<16x1xf32>
      %68 = arith.maximumf %66, %67 : vector<16x1xf32>
      %69 = vector.broadcast %59 : vector<16x1xf32> to vector<16x32xf32>
      %70 = arith.subf %55, %69 : vector<16x32xf32>
      %cst_27 = arith.constant 9.99999974E-6 : f32
      %71 = vector.broadcast %cst_27 : f32 to vector<16x1xf32>
      %72 = arith.addf %68, %71 : vector<16x1xf32>
      %73 = math.rsqrt %72 : vector<16x1xf32>
      %74 = vector.broadcast %73 : vector<16x1xf32> to vector<16x32xf32>
      %75 = arith.mulf %70, %74 : vector<16x32xf32>
      %c1 = arith.constant 1 : index
      %c0_28 = arith.constant 0 : index
      %76 = vector.load %arg7[%c1, %c0_28] : memref<3x32xf32, #tpu.memory_space<vmem>>, vector<1x32xf32>
      %77 = vector.shape_cast %76 : vector<1x32xf32> to vector<32xf32>
      %78 = vector.shape_cast %77 : vector<32xf32> to vector<1x32xf32>
      %79 = vector.broadcast %78 : vector<1x32xf32> to vector<16x32xf32>
      %80 = arith.mulf %75, %79 : vector<16x32xf32>
      %c1_29 = arith.constant 1 : index
      %c0_30 = arith.constant 0 : index
      %81 = vector.load %arg8[%c1_29, %c0_30] : memref<3x32xf32, #tpu.memory_space<vmem>>, vector<1x32xf32>
      %82 = vector.shape_cast %81 : vector<1x32xf32> to vector<32xf32>
      %83 = vector.shape_cast %82 : vector<32xf32> to vector<1x32xf32>
      %84 = vector.broadcast %83 : vector<1x32xf32> to vector<16x32xf32>
      %85 = arith.addf %80, %84 : vector<16x32xf32>
      %86 = vector.broadcast %35 : vector<16x1xf32> to vector<16x32xf32>
      %87 = arith.mulf %85, %86 : vector<16x32xf32>
      %c0_31 = arith.constant 0 : index
      %c0_32 = arith.constant 0 : index
      %88 = vector.load %arg10[%c0_31, %c0_32] : memref<16x32xf32, #tpu.memory_space<vmem>>, vector<16x32xf32>
      tpu.vector_store %arg10[%c0_31, %c0_32], %87 {strides = array<i32>} : memref<16x32xf32, #tpu.memory_space<vmem>>, vector<16x32xf32>,
    } else {
    }
    %c3_i32 = arith.constant 3 : i32
    %31 = arith.cmpi eq, %arg1, %c3_i32 : i32
    %32 = arith.extui %31 : i1 to i32
    %c0_i32_12 = arith.constant 0 : i32
    %33 = arith.cmpi ne, %32, %c0_i32_12 : i32
    scf.if %33 {
      %c0_13 = arith.constant 0 : index
      %c0_14 = arith.constant 0 : index
      %34 = vector.load %arg2[%c0_13, %c0_14] : memref<16x32xf32, #tpu.memory_space<vmem>>, vector<16x32xf32>
      %c0_15 = arith.constant 0 : index
      %c0_16 = arith.constant 0 : index
      %35 = vector.load %arg3[%c0_15, %c0_16] : memref<16x1xf32, #tpu.memory_space<vmem>>, vector<16x1xf32>
      %c0_17 = arith.constant 0 : index
      %c0_18 = arith.constant 0 : index
      %36 = vector.load %arg14[%c0_17, %c0_18] : memref<16x8xf32, #tpu.memory_space<vmem>>, vector<16x8xf32>
      %37 = vector.extract_strided_slice %36 {offsets = [0, 4], sizes = [16, 1], strides = [1, 1]} : vector<16x8xf32> to vector<16x1xf32>
      %38 = vector.extract_strided_slice %36 {offsets = [0, 5], sizes = [16, 1], strides = [1, 1]} : vector<16x8xf32> to vector<16x1xf32>
      %39 = arith.maximumf %37, %38 : vector<16x1xf32>
      %40 = arith.subf %37, %39 : vector<16x1xf32>
      %41 = math.exp %40 : vector<16x1xf32>
      %42 = arith.subf %38, %39 : vector<16x1xf32>
      %43 = math.exp %42 : vector<16x1xf32>
      %44 = arith.addf %41, %43 : vector<16x1xf32>
      %cst_19 = arith.constant 1.000000e+00 : f32
      %45 = vector.broadcast %cst_19 : f32 to vector<16x1xf32>
      %46 = arith.divf %45, %44 : vector<16x1xf32>
      %47 = arith.mulf %41, %46 : vector<16x1xf32>
      %c0_20 = arith.constant 0 : index
      %c0_21 = arith.constant 0 : index
      %48 = vector.load %arg13[%c0_20, %c0_21] : memref<16x32xf32, #tpu.memory_space<vmem>>, vector<16x32xf32>
      %49 = vector.broadcast %47 : vector<16x1xf32> to vector<16x32xf32>
      %50 = arith.mulf %49, %48 : vector<16x32xf32>
      %51 = arith.mulf %43, %46 : vector<16x1xf32>
      %52 = vector.broadcast %51 : vector<16x1xf32> to vector<16x32xf32>
      %53 = arith.mulf %52, %21 : vector<16x32xf32>
      %54 = arith.addf %50, %53 : vector<16x32xf32>
      %55 = arith.addf %34, %54 : vector<16x32xf32>
      %cst_22 = arith.constant dense<0.000000e+00> : vector<16xf32>
      %56 = vector.multi_reduction <add>, %55, %cst_22 [1] : vector<16x32xf32> to vector<16xf32>
      %57 = vector.shape_cast %56 : vector<16xf32> to vector<16x1xf32>
      %cst_23 = arith.constant 3.125000e-02 : f32
      %58 = vector.broadcast %cst_23 : f32 to vector<16x1xf32>
      %59 = arith.mulf %57, %58 : vector<16x1xf32>
      %60 = arith.mulf %55, %55 : vector<16x32xf32>
      %cst_24 = arith.constant dense<0.000000e+00> : vector<16xf32>
      %61 = vector.multi_reduction <add>, %60, %cst_24 [1] : vector<16x32xf32> to vector<16xf32>
      %62 = vector.shape_cast %61 : vector<16xf32> to vector<16x1xf32>
      %cst_25 = arith.constant 3.125000e-02 : f32
      %63 = vector.broadcast %cst_25 : f32 to vector<16x1xf32>
      %64 = arith.mulf %62, %63 : vector<16x1xf32>
      %65 = arith.mulf %59, %59 : vector<16x1xf32>
      %66 = arith.subf %64, %65 : vector<16x1xf32>
      %cst_26 = arith.constant 0.000000e+00 : f32
      %67 = vector.broadcast %cst_26 : f32 to vector<16x1xf32>
      %68 = arith.maximumf %66, %67 : vector<16x1xf32>
      %69 = vector.broadcast %59 : vector<16x1xf32> to vector<16x32xf32>
      %70 = arith.subf %55, %69 : vector<16x32xf32>
      %cst_27 = arith.constant 9.99999974E-6 : f32
      %71 = vector.broadcast %cst_27 : f32 to vector<16x1xf32>
      %72 = arith.addf %68, %71 : vector<16x1xf32>
      %73 = math.rsqrt %72 : vector<16x1xf32>
      %74 = vector.broadcast %73 : vector<16x1xf32> to vector<16x32xf32>
      %75 = arith.mulf %70, %74 : vector<16x32xf32>
      %c2 = arith.constant 2 : index
      %c0_28 = arith.constant 0 : index
      %76 = vector.load %arg7[%c2, %c0_28] : memref<3x32xf32, #tpu.memory_space<vmem>>, vector<1x32xf32>
      %77 = vector.shape_cast %76 : vector<1x32xf32> to vector<32xf32>
      %78 = vector.shape_cast %77 : vector<32xf32> to vector<1x32xf32>
      %79 = vector.broadcast %78 : vector<1x32xf32> to vector<16x32xf32>
      %80 = arith.mulf %75, %79 : vector<16x32xf32>
      %c2_29 = arith.constant 2 : index
      %c0_30 = arith.constant 0 : index
      %81 = vector.load %arg8[%c2_29, %c0_30] : memref<3x32xf32, #tpu.memory_space<vmem>>, vector<1x32xf32>
      %82 = vector.shape_cast %81 : vector<1x32xf32> to vector<32xf32>
      %83 = vector.shape_cast %82 : vector<32xf32> to vector<1x32xf32>
      %84 = vector.broadcast %83 : vector<1x32xf32> to vector<16x32xf32>
      %85 = arith.addf %80, %84 : vector<16x32xf32>
      %86 = vector.broadcast %35 : vector<16x1xf32> to vector<16x32xf32>
      %87 = arith.mulf %85, %86 : vector<16x32xf32>
      %c0_31 = arith.constant 0 : index
      %c0_32 = arith.constant 0 : index
      %88 = vector.load %arg11[%c0_31, %c0_32] : memref<16x32xf32, #tpu.memory_space<vmem>>, vector<16x32xf32>
      tpu.vector_store %arg11[%c0_31, %c0_32], %87 {strides = array<i32>} : memref<16x32xf32, #tpu.memory_space<vmem>>, vector<16x32xf32>,
    } else {
    }
    return
  }
  func.func @transform_0(%arg0: i32, %arg1: i32) -> (i32, i32) {
    %c0_i32 = arith.constant 0 : i32
    %c0_i32_0 = arith.constant 0 : i32
    return %arg0, %c0_i32 : i32, i32
  }
  func.func @transform_1(%arg0: i32, %arg1: i32) -> (i32, i32) {
    %c0_i32 = arith.constant 0 : i32
    %c0_i32_0 = arith.constant 0 : i32
    return %arg0, %c0_i32 : i32, i32
  }
  func.func @transform_2(%arg0: i32, %arg1: i32) -> (i32, i32, i32) {
    %c0_i32 = arith.constant 0 : i32
    %c0_i32_0 = arith.constant 0 : i32
    %c0_i32_1 = arith.constant 0 : i32
    %c0_i32_2 = arith.constant 0 : i32
    return %c0_i32, %c0_i32_0, %c0_i32_1 : i32, i32, i32
  }
  func.func @transform_3(%arg0: i32, %arg1: i32) -> (i32, i32, i32) {
    %c0_i32 = arith.constant 0 : i32
    %c0_i32_0 = arith.constant 0 : i32
    %c0_i32_1 = arith.constant 0 : i32
    %c0_i32_2 = arith.constant 0 : i32
    return %c0_i32, %c0_i32_0, %c0_i32_1 : i32, i32, i32
  }
  func.func @transform_4(%arg0: i32, %arg1: i32) -> (i32, i32) {
    %c0_i32 = arith.constant 0 : i32
    %c0_i32_0 = arith.constant 0 : i32
    %c0_i32_1 = arith.constant 0 : i32
    return %c0_i32, %c0_i32_0 : i32, i32
  }
  func.func @transform_5(%arg0: i32, %arg1: i32) -> (i32, i32) {
    %c0_i32 = arith.constant 0 : i32
    %c0_i32_0 = arith.constant 0 : i32
    %c0_i32_1 = arith.constant 0 : i32
    return %c0_i32, %c0_i32_0 : i32, i32
  }
  func.func @transform_6(%arg0: i32, %arg1: i32) -> (i32, i32) {
    %c0_i32 = arith.constant 0 : i32
    %c0_i32_0 = arith.constant 0 : i32
    %c0_i32_1 = arith.constant 0 : i32
    return %c0_i32, %c0_i32_0 : i32, i32
  }
  func.func @transform_7(%arg0: i32, %arg1: i32) -> (i32, i32) {
    %c0_i32 = arith.constant 0 : i32
    %c0_i32_0 = arith.constant 0 : i32
    return %arg0, %c0_i32 : i32, i32
  }
  func.func @transform_8(%arg0: i32, %arg1: i32) -> (i32, i32) {
    %c0_i32 = arith.constant 0 : i32
    %c0_i32_0 = arith.constant 0 : i32
    return %arg0, %c0_i32 : i32, i32
  }
  func.func @transform_9(%arg0: i32, %arg1: i32) -> (i32, i32) {
    %c0_i32 = arith.constant 0 : i32
    %c0_i32_0 = arith.constant 0 : i32
    return %arg0, %c0_i32 : i32, i32
  }
}

</mosaic_0001>

<llo_original>
// kernel: tpu_custom_call.1
$region0: #{tpu_custom_call.1}
  #allocation0 [shape = 'u32[]', space=smem, size = 0x4, offset = 0x4, fixed_abs, tag = 'smem constant byte address 0x4 - core index']
  #allocation1 [shape = 'u32[144,128]{1,0:T(1,128)}', space=vmem, size = 0x12000, scoped, tag = 'internal scratch']
  #allocation2 [shape = 'bf16[16,32]{1,0:T(16,128)(2,1)}', space=vmem, size = 0x1000, scoped, tag = 'scratch operand']
  #allocation3 [shape = 'f32[16,32]{1,0:T(8,128)}', space=vmem, size = 0x2000, scoped, tag = 'scratch operand']
  #allocation4 [shape = 'f32[16,8]{1,0:T(8,128)}', space=vmem, size = 0x2000, scoped, tag = 'scratch operand']
  %s0 = inlined_call_operand.hbm [shape: f32[16,32], index: 0, kind: input, shape index: {}]
  %s1 = inlined_call_operand.hbm [shape: f32[16,1], index: 1, kind: input, shape index: {}]
  %s2 = inlined_call_operand.hbm [shape: bf16[4,32,128], index: 2, kind: input, shape index: {}]
  %s3 = inlined_call_operand.hbm [shape: bf16[4,64,32], index: 3, kind: input, shape index: {}]
  %s4 = inlined_call_operand.hbm [shape: f32[32,8], index: 4, kind: input, shape index: {}]
  %s5 = inlined_call_operand.hbm [shape: f32[3,32], index: 5, kind: input, shape index: {}]
  %s6 = inlined_call_operand.hbm [shape: f32[3,32], index: 6, kind: input, shape index: {}]
  %s7 = inlined_call_operand.hbm [shape: f32[16,32], index: 7, kind: output, shape index: {0}]
  %s8 = inlined_call_operand.hbm [shape: f32[16,32], index: 8, kind: output, shape index: {1}]
  %s9 = inlined_call_operand.hbm [shape: f32[16,32], index: 9, kind: output, shape index: {2}]
  %10 = xla_tuple %s7, %s8, %s9
  %s11 = sld [smem:[#allocation0]]
  $region125: #{tpu_custom_call.1} parent=0
    _
  %s13 = ssub.s32 1, %s11
  %s14 = scalar_select 0, %s13, %s11
  $region1: #{tpu_custom_call.1} parent=0
    #allocation5 [shape = 'u8[8192]{0}', space=vmem, size = 0x2000, scoped, tag = 'input window, operand 0, single buffered']
    #allocation6 [shape = 's32[2]{0}', space=sflag, size = 0x8, scoped, tag = 'scoped memory for tpu_custom_call.1']
    #allocation7 [shape = 's32[2]{0}', space=sflag, size = 0x8, scoped, tag = 'scoped memory for tpu_custom_call.1']
    #allocation8 [shape = 'u8[8192]{0}', space=vmem, size = 0x2000, scoped, tag = 'input window, operand 1, single buffered']
    #allocation9 [shape = 's32[1]{0}', space=sflag, size = 0x4, scoped, tag = 'scoped memory for tpu_custom_call.1']
    #allocation10 [shape = 'u8[32768]{0}', space=vmem, size = 0x8000, scoped, tag = 'input window, operand 2, single buffered']
    #allocation11 [shape = 'u8[65536]{0}', space=vmem, size = 0x10000, scoped, tag = 'input window, operand 3, single buffered']
    #allocation12 [shape = 's32[1]{0}', space=sflag, size = 0x4, scoped, tag = 'scoped memory for tpu_custom_call.1']
    #allocation13 [shape = 'u8[16384]{0}', space=vmem, size = 0x4000, scoped, tag = 'input window, operand 4, single buffered']
    #allocation14 [shape = 'u8[2048]{0}', space=vmem, size = 0x800, scoped, tag = 'input window, operand 5, single buffered']
    #allocation15 [shape = 's32[1]{0}', space=sflag, size = 0x4, scoped, tag = 'scoped memory for tpu_custom_call.1']
    #allocation16 [shape = 'u8[2048]{0}', space=vmem, size = 0x800, scoped, tag = 'input window, operand 6, single buffered']
    #allocation17 [shape = 'u8[8192]{0}', space=vmem, size = 0x2000, scoped, tag = 'output window, operand 0, single buffered']
    #allocation18 [shape = 'u8[8192]{0}', space=vmem, size = 0x2000, scoped, tag = 'output window, operand 1, single buffered']
    #allocation19 [shape = 's32[1]{0}', space=sflag, size = 0x4, scoped, tag = 'scoped memory for tpu_custom_call.1']
    #allocation20 [shape = 'u8[8192]{0}', space=vmem, size = 0x2000, scoped, tag = 'output window, operand 2, single buffered']
    %15 = vsyncpa [#allocation6], 0
    %16 = vsyncpa [#allocation9], 0
    %17 = vsyncpa [#allocation12], 0
    %18 = vsyncpa [#allocation15], 0
    %19 = vsyncpa [#allocation7], 0
    %20 = vsyncpa [#allocation19], 0
    loop: start=0, step=1, limit=6
    $region2: #{tpu_custom_call.1} parent=1 // loop_pre_header
      _
    $region3: #{tpu_custom_call.1} parent=1 // loop_header
      %s22 = sphi 0, %s26
      %p23 = scmp.ge.s32.totalorder %s22, 6
      %s29 = sphi 0, %s41
      %s30 = sphi 0, %s37
      %s31 = sphi 0, %s29
      %s32 = sphi 0, %s30
      %s33 = sphi 0, %s31
      %s34 = sphi 0, %s32
      %s44 = sphi 0, %s46
      %s47 = sphi 0, %s44
      %s48 = sphi 0, %s47
      %s64 = sphi 0, %s48
      %s70 = sphi 0, %s72
      %s73 = sphi 0, %s70
      %s74 = sphi 0, %s73
      %s90 = sphi 0, %s74
      %s94 = sphi 0, %s94
      %s96 = sphi 0, %s94
      %s97 = sphi 0, %s96
      %s111 = sphi 0, %s97
      %s115 = sphi 0, %s115
      %s117 = sphi 0, %s115
      %s118 = sphi 0, %s117
      %s132 = sphi 0, %s118
      %s136 = sphi 0, %s136
      %s138 = sphi 0, %s136
      %s139 = sphi 0, %s138
      %s153 = sphi 0, %s139
      %s157 = sphi 0, %s157
      %s159 = sphi 0, %s157
      %s160 = sphi 0, %s159
      %s174 = sphi 0, %s160
      %s178 = sphi 0, %s178
      %s180 = sphi 0, %s178
      %s181 = sphi 0, %s180
      %s195 = sphi 0, %s181
      %s201 = sphi 0, %s203
      %s204 = sphi 0, %s201
      %s205 = sphi 0, %s204
      %s221 = sphi 0, %s205
      %s227 = sphi 0, %s229
      %s230 = sphi 0, %s227
      %s231 = sphi 0, %s230
      %s247 = sphi 0, %s231
      %s253 = sphi 0, %s255
      %s256 = sphi 0, %s253
      %s257 = sphi 0, %s256
      %s273 = sphi 0, %s257
    $region4: #{tpu_custom_call.1} parent=1 // loop_header_branch
      %25 = sbr.rel (%p23) target = $region8
    $region5: #{tpu_custom_call.1} parent=1 // loop_body
      %s27 = ssub.s32 %s22, 1
      %s28 = ssub.s32 %s22, 2
      %s35 = sadd.s32 1, %s30
      %p36 = scmp.ge.s32.totalorder %s35, 4
      %s37 = scalar_select %p36, 0, %s35
      %s38 = sadd.s32 1, %s29
      %s39 = scalar_select %p36, %s38, %s29
      %p40 = scmp.ge.s32.totalorder %s39, 1
      %s41 = scalar_select %p40, 0, %s39
      %s42 = ssub.s32 %s29, %s41
      %p43 = scmp.eq.s32.totalorder %s42, 0
      %s45 = sadd.s32 %s44, 1
      %s46 = scalar_select %p43, %s44, %s45
      %p49 = pneg %p43
      %p50 = scmp.eq.s32.totalorder %s22, 3
      %p51 = por %p49, %p50
      %p52 = scmp.ne.s32.totalorder %s44, %s47
      %p53 = scmp.eq.s32.totalorder %s22, 0
      %p54 = por %p52, %p53
      %p55 = scmp.ne.s32.totalorder %s44, %s47
      %p56 = scmp.eq.s32.totalorder %s27, 3
      %p57 = por %p55, %p56
      %p58 = scmp.ne.s32.totalorder %s47, %s48
      %p59 = scmp.eq.s32.totalorder %s27, 0
      %p60 = por %p58, %p59
      %p61 = scmp.ne.s32.totalorder %s47, %s48
      %p62 = scmp.eq.s32.totalorder %s28, 3
      %p63 = por %p61, %p62
      %p65 = scmp.ne.s32.totalorder %s48, %s64
      %p66 = scmp.eq.s32.totalorder %s28, 0
      %p67 = por %p65, %p66
      %s68 = ssub.s32 %s29, %s41
      %p69 = scmp.eq.s32.totalorder %s68, 0
      %s71 = sadd.s32 %s70, 1
      %s72 = scalar_select %p69, %s70, %s71
      %p75 = pneg %p69
      %p76 = scmp.eq.s32.totalorder %s22, 3
      %p77 = por %p75, %p76
      %p78 = scmp.ne.s32.totalorder %s70, %s73
      %p79 = scmp.eq.s32.totalorder %s22, 0
      %p80 = por %p78, %p79
      %p81 = scmp.ne.s32.totalorder %s70, %s73
      %p82 = scmp.eq.s32.totalorder %s27, 3
      %p83 = por %p81, %p82
      %p84 = scmp.ne.s32.totalorder %s73, %s74
      %p85 = scmp.eq.s32.totalorder %s27, 0
      %p86 = por %p84, %p85
      %p87 = scmp.ne.s32.totalorder %s73, %s74
      %p88 = scmp.eq.s32.totalorder %s28, 3
      %p89 = por %p87, %p88
      %p91 = scmp.ne.s32.totalorder %s74, %s90
      %p92 = scmp.eq.s32.totalorder %s28, 0
      %p93 = por %p91, %p92
      %s95 = sadd.s32 %s94, 1
      %p98 = scmp.eq.s32.totalorder %s22, 3
      %p99 = scmp.ne.s32.totalorder %s94, %s96
      %p100 = scmp.eq.s32.totalorder %s22, 0
      %p101 = por %p99, %p100
      %p102 = scmp.ne.s32.totalorder %s94, %s96
      %p103 = scmp.eq.s32.totalorder %s27, 3
      %p104 = por %p102, %p103
      %p105 = scmp.ne.s32.totalorder %s96, %s97
      %p106 = scmp.eq.s32.totalorder %s27, 0
      %p107 = por %p105, %p106
      %p108 = scmp.ne.s32.totalorder %s96, %s97
      %p109 = scmp.eq.s32.totalorder %s28, 3
      %p110 = por %p108, %p109
      %p112 = scmp.ne.s32.totalorder %s97, %s111
      %p113 = scmp.eq.s32.totalorder %s28, 0
      %p114 = por %p112, %p113
      %s116 = sadd.s32 %s115, 1
      %p119 = scmp.eq.s32.totalorder %s22, 3
      %p120 = scmp.ne.s32.totalorder %s115, %s117
      %p121 = scmp.eq.s32.totalorder %s22, 0
      %p122 = por %p120, %p121
      %p123 = scmp.ne.s32.totalorder %s115, %s117
      %p124 = scmp.eq.s32.totalorder %s27, 3
      %p125 = por %p123, %p124
      %p126 = scmp.ne.s32.totalorder %s117, %s118
      %p127 = scmp.eq.s32.totalorder %s27, 0
      %p128 = por %p126, %p127
      %p129 = scmp.ne.s32.totalorder %s117, %s118
      %p130 = scmp.eq.s32.totalorder %s28, 3
      %p131 = por %p129, %p130
      %p133 = scmp.ne.s32.totalorder %s118, %s132
      %p134 = scmp.eq.s32.totalorder %s28, 0
      %p135 = por %p133, %p134
      %s137 = sadd.s32 %s136, 1
      %p140 = scmp.eq.s32.totalorder %s22, 3
      %p141 = scmp.ne.s32.totalorder %s136, %s138
      %p142 = scmp.eq.s32.totalorder %s22, 0
      %p143 = por %p141, %p142
      %p144 = scmp.ne.s32.totalorder %s136, %s138
      %p145 = scmp.eq.s32.totalorder %s27, 3
      %p146 = por %p144, %p145
      %p147 = scmp.ne.s32.totalorder %s138, %s139
      %p148 = scmp.eq.s32.totalorder %s27, 0
      %p149 = por %p147, %p148
      %p150 = scmp.ne.s32.totalorder %s138, %s139
      %p151 = scmp.eq.s32.totalorder %s28, 3
      %p152 = por %p150, %p151
      %p154 = scmp.ne.s32.totalorder %s139, %s153
      %p155 = scmp.eq.s32.totalorder %s28, 0
      %p156 = por %p154, %p155
      %s158 = sadd.s32 %s157, 1
      %p161 = scmp.eq.s32.totalorder %s22, 3
      %p162 = scmp.ne.s32.totalorder %s157, %s159
      %p163 = scmp.eq.s32.totalorder %s22, 0
      %p164 = por %p162, %p163
      %p165 = scmp.ne.s32.totalorder %s157, %s159
      %p166 = scmp.eq.s32.totalorder %s27, 3
      %p167 = por %p165, %p166
      %p168 = scmp.ne.s32.totalorder %s159, %s160
      %p169 = scmp.eq.s32.totalorder %s27, 0
      %p170 = por %p168, %p169
      %p171 = scmp.ne.s32.totalorder %s159, %s160
      %p172 = scmp.eq.s32.totalorder %s28, 3
      %p173 = por %p171, %p172
      %p175 = scmp.ne.s32.totalorder %s160, %s174
      %p176 = scmp.eq.s32.totalorder %s28, 0
      %p177 = por %p175, %p176
      %s179 = sadd.s32 %s178, 1
      %p182 = scmp.eq.s32.totalorder %s22, 3
      %p183 = scmp.ne.s32.totalorder %s178, %s180
      %p184 = scmp.eq.s32.totalorder %s22, 0
      %p185 = por %p183, %p184
      %p186 = scmp.ne.s32.totalorder %s178, %s180
      %p187 = scmp.eq.s32.totalorder %s27, 3
      %p188 = por %p186, %p187
      %p189 = scmp.ne.s32.totalorder %s180, %s181
      %p190 = scmp.eq.s32.totalorder %s27, 0
      %p191 = por %p189, %p190
      %p192 = scmp.ne.s32.totalorder %s180, %s181
      %p193 = scmp.eq.s32.totalorder %s28, 3
      %p194 = por %p192, %p193
      %p196 = scmp.ne.s32.totalorder %s181, %s195
      %p197 = scmp.eq.s32.totalorder %s28, 0
      %p198 = por %p196, %p197
      %s199 = ssub.s32 %s29, %s41
      %p200 = scmp.eq.s32.totalorder %s199, 0
      %s202 = sadd.s32 %s201, 1
      %s203 = scalar_select %p200, %s201, %s202
      %p206 = pneg %p200
      %p207 = scmp.eq.s32.totalorder %s22, 3
      %p208 = por %p206, %p207
      %p209 = scmp.ne.s32.totalorder %s201, %s204
      %p210 = scmp.eq.s32.totalorder %s22, 0
      %p211 = por %p209, %p210
      %p212 = scmp.ne.s32.totalorder %s201, %s204
      %p213 = scmp.eq.s32.totalorder %s27, 3
      %p214 = por %p212, %p213
      %p215 = scmp.ne.s32.totalorder %s204, %s205
      %p216 = scmp.eq.s32.totalorder %s27, 0
      %p217 = por %p215, %p216
      %p218 = scmp.ne.s32.totalorder %s204, %s205
      %p219 = scmp.eq.s32.totalorder %s28, 3
      %p220 = por %p218, %p219
      %p222 = scmp.ne.s32.totalorder %s205, %s221
      %p223 = scmp.eq.s32.totalorder %s28, 0
      %p224 = por %p222, %p223
      %s225 = ssub.s32 %s29, %s41
      %p226 = scmp.eq.s32.totalorder %s225, 0
      %s228 = sadd.s32 %s227, 1
      %s229 = scalar_select %p226, %s227, %s228
      %p232 = pneg %p226
      %p233 = scmp.eq.s32.totalorder %s22, 3
      %p234 = por %p232, %p233
      %p235 = scmp.ne.s32.totalorder %s227, %s230
      %p236 = scmp.eq.s32.totalorder %s22, 0
      %p237 = por %p235, %p236
      %p238 = scmp.ne.s32.totalorder %s227, %s230
      %p239 = scmp.eq.s32.totalorder %s27, 3
      %p240 = por %p238, %p239
      %p241 = scmp.ne.s32.totalorder %s230, %s231
      %p242 = scmp.eq.s32.totalorder %s27, 0
      %p243 = por %p241, %p242
      %p244 = scmp.ne.s32.totalorder %s230, %s231
      %p245 = scmp.eq.s32.totalorder %s28, 3
      %p246 = por %p244, %p245
      %p248 = scmp.ne.s32.totalorder %s231, %s247
      %p249 = scmp.eq.s32.totalorder %s28, 0
      %p250 = por %p248, %p249
      %s251 = ssub.s32 %s29, %s41
      %p252 = scmp.eq.s32.totalorder %s251, 0
      %s254 = sadd.s32 %s253, 1
      %s255 = scalar_select %p252, %s253, %s254
      %p258 = pneg %p252
      %p259 = scmp.eq.s32.totalorder %s22, 3
      %p260 = por %p258, %p259
      %p261 = scmp.ne.s32.totalorder %s253, %s256
      %p262 = scmp.eq.s32.totalorder %s22, 0
      %p263 = por %p261, %p262
      %p264 = scmp.ne.s32.totalorder %s253, %s256
      %p265 = scmp.eq.s32.totalorder %s27, 3
      %p266 = por %p264, %p265
      %p267 = scmp.ne.s32.totalorder %s256, %s257
      %p268 = scmp.eq.s32.totalorder %s27, 0
      %p269 = por %p267, %p268
      %p270 = scmp.ne.s32.totalorder %s256, %s257
      %p271 = scmp.eq.s32.totalorder %s28, 3
      %p272 = por %p270, %p271
      %p274 = scmp.ne.s32.totalorder %s257, %s273
      %p275 = scmp.eq.s32.totalorder %s28, 0
      %p276 = por %p274, %p275
      %p277 = scmp.le.s32.totalorder 1, %s22
      %p278 = scmp.lt.s32.totalorder %s22, 5
      %p279 = pnand %p277, %p278
      %p280 = pneg %p279
      // Predicated region
      $region9: #{tpu_custom_call.1} parent=5 // pred_check
        _
      $region10: #{tpu_custom_call.1} parent=5 // pred_check_branch
        %282 = sbr.rel (%p279) target = $region12
      $region11: #{tpu_custom_call.1} parent=5 // pred_region
        %s283 = ssub.s32 %s22, 1
        // Predicated region
        $region13: #{tpu_custom_call.1} parent=11 // pred_check
          %p284 = pneg %p60
        $region14: #{tpu_custom_call.1} parent=11 // pred_check_branch
          %286 = sbr.rel (%p284) target = $region16
        $region15: #{tpu_custom_call.1} parent=11 // pred_region
          %s287 = smul.u32 2, %s31
          %s289 = ssub.s32 256, 256
          %290 = vsyncadd [#allocation6], %s289
          %s291 = smul.addr %s287, 128
          %s292 = scalar_lea.hbm %s0, %s291
          %s293 = sshll.u32 [#allocation5], 4
          %s294 = int_to_ptr.vmem [resolvable:$true] %s293
          %299 = dma.hbm_to_vmem [thread:$0]  %s292, 256, %s294, [#allocation6], 128, 128, 8
        $region16: #{tpu_custom_call.1} parent=11 // pred_fallthru
          _
        // Predicated region
        $region17: #{tpu_custom_call.1} parent=11 // pred_check
          %p300 = pneg %p86
        $region18: #{tpu_custom_call.1} parent=11 // pred_check_branch
          %302 = sbr.rel (%p300) target = $region20
        $region19: #{tpu_custom_call.1} parent=11 // pred_region
          %s303 = smul.u32 2, %s31
          %s305 = ssub.s32 256, 256
          %306 = vsyncadd [#allocation9], %s305
          %s307 = smul.addr %s303, 128
          %s308 = scalar_lea.hbm %s1, %s307
          %s309 = sshll.u32 [#allocation8], 4
          %s310 = int_to_ptr.vmem [resolvable:$true] %s309
          %315 = dma.hbm_to_vmem [thread:$0]  %s308, 256, %s310, [#allocation9], 128, 128, 8
        $region20: #{tpu_custom_call.1} parent=11 // pred_fallthru
          _
        // Predicated region
        $region21: #{tpu_custom_call.1} parent=11 // pred_check
          %p316 = pneg %p107
        $region22: #{tpu_custom_call.1} parent=11 // pred_check_branch
          %318 = sbr.rel (%p316) target = $region24
        $region23: #{tpu_custom_call.1} parent=11 // pred_region
          %s320 = ssub.s32 1024, 1024
          %321 = vsyncadd [#allocation9], %s320
          %s322 = sshll.u32 [#allocation10], 4
          %s323 = int_to_ptr.vmem [resolvable:$true] %s322
          %328 = dma.hbm_to_vmem [thread:$0]  %s2, 1024, %s323, [#allocation9], 64, 64, 4
        $region24: #{tpu_custom_call.1} parent=11 // pred_fallthru
          _
        // Predicated region
        $region25: #{tpu_custom_call.1} parent=11 // pred_check
          %p329 = pneg %p128
        $region26: #{tpu_custom_call.1} parent=11 // pred_check_branch
          %331 = sbr.rel (%p329) target = $region28
        $region27: #{tpu_custom_call.1} parent=11 // pred_region
          %s333 = ssub.s32 2048, 2048
          %334 = vsyncadd [#allocation12], %s333
          %s335 = sshll.u32 [#allocation11], 4
          %s336 = int_to_ptr.vmem [resolvable:$true] %s335
          %341 = dma.hbm_to_vmem [thread:$0]  %s3, 2048, %s336, [#allocation12], 64, 64, 4
        $region28: #{tpu_custom_call.1} parent=11 // pred_fallthru
          _
        // Predicated region
        $region29: #{tpu_custom_call.1} parent=11 // pred_check
          %p342 = pneg %p149
        $region30: #{tpu_custom_call.1} parent=11 // pred_check_branch
          %344 = sbr.rel (%p342) target = $region32
        $region31: #{tpu_custom_call.1} parent=11 // pred_region
          %s346 = ssub.s32 512, 512
          %347 = vsyncadd [#allocation12], %s346
          %s348 = sshll.u32 [#allocation13], 4
          %s349 = int_to_ptr.vmem [resolvable:$true] %s348
          %354 = dma.hbm_to_vmem [thread:$0]  %s4, 512, %s349, [#allocation12], 128, 128, 8
        $region32: #{tpu_custom_call.1} parent=11 // pred_fallthru
          _
        // Predicated region
        $region33: #{tpu_custom_call.1} parent=11 // pred_check
          %p355 = pneg %p170
        $region34: #{tpu_custom_call.1} parent=11 // pred_check_branch
          %357 = sbr.rel (%p355) target = $region36
        $region35: #{tpu_custom_call.1} parent=11 // pred_region
          %s359 = ssub.s32 64, 64
          %360 = vsyncadd [#allocation15], %s359
          %s362 = sshll.u32 [#allocation14], 4
          %s363 = int_to_ptr.vmem [resolvable:$true] %s362
          %365 = dma.hbm_to_vmem [thread:$0]  %s5, 64, %s363, [#allocation15]
        $region36: #{tpu_custom_call.1} parent=11 // pred_fallthru
          _
        // Predicated region
        $region37: #{tpu_custom_call.1} parent=11 // pred_check
          %p366 = pneg %p191
        $region38: #{tpu_custom_call.1} parent=11 // pred_check_branch
          %368 = sbr.rel (%p366) target = $region40
        $region39: #{tpu_custom_call.1} parent=11 // pred_region
          %s370 = ssub.s32 64, 64
          %371 = vsyncadd [#allocation15], %s370
          %s373 = sshll.u32 [#allocation16], 4
          %s374 = int_to_ptr.vmem [resolvable:$true] %s373
          %376 = dma.hbm_to_vmem [thread:$0]  %s6, 64, %s374, [#allocation15]
        $region40: #{tpu_custom_call.1} parent=11 // pred_fallthru
          _
      $region12: #{tpu_custom_call.1} parent=5 // pred_fallthru
        _
      %p377 = scmp.lt.s32.totalorder %s22, 4
      // Predicated region
      $region41: #{tpu_custom_call.1} parent=5 // pred_check
        %p378 = pneg %p377
      $region42: #{tpu_custom_call.1} parent=5 // pred_check_branch
        %380 = sbr.rel (%p378) target = $region44
      $region43: #{tpu_custom_call.1} parent=5 // pred_region
        _
      $region44: #{tpu_custom_call.1} parent=5 // pred_fallthru
        _
      %p381 = scmp.le.s32.totalorder 1, %s22
      %p382 = scmp.lt.s32.totalorder %s22, 5
      %p383 = pnand %p381, %p382
      %p384 = pneg %p383
      // Predicated region
      $region45: #{tpu_custom_call.1} parent=5 // pred_check
        _
      $region46: #{tpu_custom_call.1} parent=5 // pred_check_branch
        %386 = sbr.rel (%p383) target = $region48
      $region47: #{tpu_custom_call.1} parent=5 // pred_region
        %s387 = ssub.s32 %s22, 1
        // Predicated region
        $region49: #{tpu_custom_call.1} parent=47 // pred_check
          %p388 = pneg %p60
        $region50: #{tpu_custom_call.1} parent=47 // pred_check_branch
          %390 = sbr.rel (%p388) target = $region52
        $region51: #{tpu_custom_call.1} parent=47 // pred_region
          %391 = dma.done [#allocation6], 256
        $region52: #{tpu_custom_call.1} parent=47 // pred_fallthru
          _
        // Predicated region
        $region53: #{tpu_custom_call.1} parent=47 // pred_check
          %p392 = pneg %p86
        $region54: #{tpu_custom_call.1} parent=47 // pred_check_branch
          %394 = sbr.rel (%p392) target = $region56
        $region55: #{tpu_custom_call.1} parent=47 // pred_region
          %395 = dma.done [#allocation9], 256
        $region56: #{tpu_custom_call.1} parent=47 // pred_fallthru
          _
        // Predicated region
        $region57: #{tpu_custom_call.1} parent=47 // pred_check
          %p396 = pneg %p107
        $region58: #{tpu_custom_call.1} parent=47 // pred_check_branch
          %398 = sbr.rel (%p396) target = $region60
        $region59: #{tpu_custom_call.1} parent=47 // pred_region
          %399 = dma.done [#allocation9], 1024
        $region60: #{tpu_custom_call.1} parent=47 // pred_fallthru
          _
        // Predicated region
        $region61: #{tpu_custom_call.1} parent=47 // pred_check
          %p400 = pneg %p128
        $region62: #{tpu_custom_call.1} parent=47 // pred_check_branch
          %402 = sbr.rel (%p400) target = $region64
        $region63: #{tpu_custom_call.1} parent=47 // pred_region
          %403 = dma.done [#allocation12], 2048
        $region64: #{tpu_custom_call.1} parent=47 // pred_fallthru
          _
        // Predicated region
        $region65: #{tpu_custom_call.1} parent=47 // pred_check
          %p404 = pneg %p149
        $region66: #{tpu_custom_call.1} parent=47 // pred_check_branch
          %406 = sbr.rel (%p404) target = $region68
        $region67: #{tpu_custom_call.1} parent=47 // pred_region
          %407 = dma.done [#allocation12], 512
        $region68: #{tpu_custom_call.1} parent=47 // pred_fallthru
          _
        // Predicated region
        $region69: #{tpu_custom_call.1} parent=47 // pred_check
          %p408 = pneg %p170
        $region70: #{tpu_custom_call.1} parent=47 // pred_check_branch
          %410 = sbr.rel (%p408) target = $region72
        $region71: #{tpu_custom_call.1} parent=47 // pred_region
          %411 = dma.done [#allocation15], 64
        $region72: #{tpu_custom_call.1} parent=47 // pred_fallthru
          _
        // Predicated region
        $region73: #{tpu_custom_call.1} parent=47 // pred_check
          %p412 = pneg %p191
        $region74: #{tpu_custom_call.1} parent=47 // pred_check_branch
          %414 = sbr.rel (%p412) target = $region76
        $region75: #{tpu_custom_call.1} parent=47 // pred_region
          %415 = dma.done [#allocation15], 64
        $region76: #{tpu_custom_call.1} parent=47 // pred_fallthru
          _
        %p416 = pneg %p60
        %p417 = pneg %p57
        %p418 = pneg %p86
        %p419 = pneg %p83
        %p420 = pneg %p107
        %p421 = pneg %p104
        %p422 = pneg %p128
        %p423 = pneg %p125
        %p424 = pneg %p149
        %p425 = pneg %p146
        %p426 = pneg %p170
        %p427 = pneg %p167
        %p428 = pneg %p191
        %p429 = pneg %p188
        %p430 = pneg %p217
        %p431 = pneg %p214
        %p432 = pneg %p243
        %p433 = pneg %p240
        %p434 = pneg %p269
        %p435 = pneg %p266
        %s436 = smul.u32 2, %s31
        %s437 = smul.u32 2, %s31
        %s438 = smul.u32 2, %s31
        %s439 = smul.u32 2, %s31
        %s440 = smul.u32 2, %s31
        %p442 = scmp.eq.s32.totalorder %s32, 0
        // Predicated region
        $region77: #{tpu_custom_call.1} parent=47 // pred_check
          %p443 = pneg %p442
        $region78: #{tpu_custom_call.1} parent=47 // pred_check_branch
          %445 = sbr.rel (%p443) target = $region80
        $region79: #{tpu_custom_call.1} parent=47 // pred_region
          %v446 = vld [vmem:[#allocation5] sm:$0xff]
          %v447 = vld [vmem:[#allocation5 + $0x8] sm:$0xff]
          %v448 = vpack.c.bf16 %v447, %v446
          %vm449 = vcmask 261120
          %450 = vst.msk [vmem:[#allocation2] sm:$0xff] %vm449, %v448
          %v451 = vld [vmem:[#allocation5] sm:$0xff]
          %v452 = vld [vmem:[#allocation5 + $0x8] sm:$0xff]
          %v453 = vld [vmem:[#allocation13] sm:$0xff]
          %v454 = vld [vmem:[#allocation13 + $0x8] sm:$0xff]
          %v455 = vld [vmem:[#allocation13 + $0x10] sm:$0xff]
          %v456 = vld [vmem:[#allocation13 + $0x18] sm:$0xff]
          %v458 = vsel %vm449, %v451, 0
          %v461 = vsel %vm449, %v452, 0
          %463 = vmatprep.subr.mxu0 0.0
          %464 = vmatpush1.msra.mxu0 %v453
          %465 = vmatprep.subr.mxu0 0.0
          %466 = vmatpush1.msra.mxu0 %v454
          %467 = vmatprep.subr.mxu0 0.0
          %468 = vmatpush1.msra.mxu0 %v455
          %469 = vmatprep.subr.mxu0 0.0
          %470 = vmatpush1.msra.mxu0 %v456
          %471 = vmatprep.subr.mxu0 0.0
          %472 = vmatpush1.msra.mxu0 0.0
          %473 = vmatprep.subr.mxu0 0.0
          %474 = vmatpush1.msra.mxu0 0.0
          %475 = vmatprep.subr.mxu0 0.0
          %476 = vmatpush1.msra.mxu0 0.0
          %477 = vmatprep.subr.mxu0 0.0
          %478 = vmatpush1.msra.mxu0 0.0
          %479 = vmatprep.subr.mxu0 0.0
          %480 = vmatpush1.msra.mxu0 0.0
          %481 = vmatprep.subr.mxu0 0.0
          %482 = vmatpush1.msra.mxu0 0.0
          %483 = vmatprep.subr.mxu0 0.0
          %484 = vmatpush1.msra.mxu0 0.0
          %485 = vmatprep.subr.mxu0 0.0
          %486 = vmatpush1.msra.mxu0 0.0
          %487 = vmatprep.subr.mxu0 0.0
          %488 = vmatpush1.msra.mxu0 0.0
          %489 = vmatprep.subr.mxu0 0.0
          %490 = vmatpush1.msra.mxu0 0.0
          %491 = vmatprep.subr.mxu0 0.0
          %492 = vmatpush1.msra.mxu0 0.0
          %493 = vmatprep.subr.mxu0 0.0
          %494 = vmatpush1.msra.mxu0 0.0
          %495 = vmatprep.subr.mxu0 0.0
          %496 = vmatpush1.msra.mxu0 0.0
          %497 = vmatprep.subr.mxu0 0.0
          %498 = vmatpush1.msra.mxu0 0.0
          %499 = vmatprep.subr.mxu0 0.0
          %500 = vmatpush1.msra.mxu0 0.0
          %501 = vmatprep.subr.mxu0 0.0
          %502 = vmatpush1.msra.mxu0 0.0
          %503 = vmatprep.subr.mxu0 0.0
          %504 = vmatpush1.msra.mxu0 0.0
          %505 = vmatprep.subr.mxu0 0.0
          %506 = vmatpush1.msra.mxu0 0.0
          %507 = vmatprep.subr.mxu0 0.0
          %508 = vmatpush1.msra.mxu0 0.0
          %509 = vmatprep.subr.mxu0 0.0
          %510 = vmatpush1.msra.mxu0 0.0
          %511 = vmatprep.subr.mxu0 0.0
          %512 = vmatpush1.msra.mxu0 0.0
          %513 = vmatprep.subr.mxu0 0.0
          %514 = vmatpush1.msra.mxu0 0.0
          %515 = vmatprep.subr.mxu0 0.0
          %516 = vmatpush1.msra.mxu0 0.0
          %517 = vmatprep.subr.mxu0 0.0
          %518 = vmatpush1.msra.mxu0 0.0
          %519 = vmatprep.subr.mxu0 0.0
          %520 = vmatpush1.msra.mxu0 0.0
          %521 = vmatprep.subr.mxu0 0.0
          %522 = vmatpush1.msra.mxu0 0.0
          %523 = vmatprep.subr.mxu0 0.0
          %524 = vmatpush1.msra.mxu0 0.0
          %525 = vmatprep.subr.mxu0 0.0
          %526 = vmatpush1.msra.mxu0 0.0
          %527 = vmatprep.mubr.f32.mxu0 0.0
          %528 = vmatmul.mubr.f32.gmra.mrb[0].mxu0 %v458
          %v529 = vpop.f32.mrb[0].mxu0
          %v530 = vadd.f32 0.0, %v529
          %v531 = vpop.f32.mrb[0].mxu0
          %532 = vmatprep.mubr.f32.mxu0 0.0
          %533 = vmatmul.mubr.f32.gmra.mrb[0].mxu0 %v461
          %v534 = vpop.f32.mrb[0].mxu0
          %v535 = vadd.f32 0.0, %v534
          %v536 = vpop.f32.mrb[0].mxu0
          %537 = vdwg.mxu0
          %vm538 = vcmask 64512
          %539 = vst.msk [vmem:[#allocation4] sm:$0xff] %vm538, %v530
          %540 = vst.msk [vmem:[#allocation4 + $0x8] sm:$0xff] %vm538, %v535
        $region80: #{tpu_custom_call.1} parent=47 // pred_fallthru
          _
        %v541 = vld [vmem:[#allocation2] sm:$0xff]
        %s542 = smul.u32 %s32, 4
        %s543 = smul.addr %s542, 4
        %s544 = scalar_lea.vmem [#allocation10], %s543
        %v545 = vld [vmem:[%s544] sm:$0xf]
        %v546 = vld [vmem:[%s544 + $0x4] sm:$0xf]
        %v547 = vld [vmem:[%s544 + $0x8] sm:$0xf]
        %v548 = vld [vmem:[%s544 + $0xc] sm:$0xf]
        %v553 = vunpack.c.l.b16 %v545
        %v554 = vunpack.c.l.b16 %v546
        %v555 = vunpack.c.l.b16 %v547
        %v556 = vunpack.c.l.b16 %v548
        %v557 = vpack.c.b16 %v554, %v553
        %v558 = vpack.c.b16 %v556, %v555
        %vm561 = vcmask 261120
        %v563 = vsel %vm561, %v541, 0
        %565 = vmatprep.subr.bf16.mxu0 0
        %566 = vmatpush1.bf16.msra.mxu0 %v557
        %567 = vmatprep.subr.bf16.mxu0 0
        %568 = vmatpush1.bf16.msra.mxu0 %v558
        %569 = vmatprep.subr.bf16.mxu0 0
        %570 = vmatpush1.bf16.msra.mxu0 0
        %571 = vmatprep.subr.bf16.mxu0 0
        %572 = vmatpush1.bf16.msra.mxu0 0
        %573 = vmatprep.subr.bf16.mxu0 0
        %574 = vmatpush1.bf16.msra.mxu0 0
        %575 = vmatprep.subr.bf16.mxu0 0
        %576 = vmatpush1.bf16.msra.mxu0 0
        %577 = vmatprep.subr.bf16.mxu0 0
        %578 = vmatpush1.bf16.msra.mxu0 0
        %579 = vmatprep.subr.bf16.mxu0 0
        %580 = vmatpush1.bf16.msra.mxu0 0
        %581 = vmatprep.subr.bf16.mxu0 0
        %582 = vmatpush1.bf16.msra.mxu0 0
        %583 = vmatprep.subr.bf16.mxu0 0
        %584 = vmatpush1.bf16.msra.mxu0 0
        %585 = vmatprep.subr.bf16.mxu0 0
        %586 = vmatpush1.bf16.msra.mxu0 0
        %587 = vmatprep.subr.bf16.mxu0 0
        %588 = vmatpush1.bf16.msra.mxu0 0
        %589 = vmatprep.subr.bf16.mxu0 0
        %590 = vmatpush1.bf16.msra.mxu0 0
        %591 = vmatprep.subr.bf16.mxu0 0
        %592 = vmatpush1.bf16.msra.mxu0 0
        %593 = vmatprep.subr.bf16.mxu0 0
        %594 = vmatpush1.bf16.msra.mxu0 0
        %595 = vmatprep.subr.bf16.mxu0 0
        %596 = vmatpush1.bf16.msra.mxu0 0
        %597 = vmatprep.mubr.bf16.mxu0 0
        %598 = vmatmul.mubr.bf16.gmra.mrb[0].mxu0 %v563
        %v599 = vpop.f32.mrb[0].mxu0
        %v600 = vadd.f32 0.0, %v599
        %v601 = vpop.f32.mrb[0].mxu0
        %v602 = vpop.f32.mrb[0].mxu0
        %v603 = vadd.f32 0.0, %v602
        %v604 = vpop.f32.mrb[0].mxu0
        %605 = vdwg.mxu0
        %v606 = vxor.u32 %v600, 2147483648
        %v607 = vxor.u32 %v603, 2147483648
        %v608 = vmul.f32 %v606, 1.442695
        %v609 = vpow.pop %v608
        %v610 = vmul.f32 %v607, 1.442695
        %v611 = vpow.pop %v610
        %v612 = vadd.f32 %v609, 1.0
        %v613 = vadd.f32 %v611, 1.0
        %v614 = vrcp.pop %v612
        %v615 = vmul.f32 1.0, %v614
        %v616 = vrcp.pop %v613
        %v617 = vmul.f32 1.0, %v616
        %v618 = vmul.f32 %v600, %v615
        %v619 = vmul.f32 %v603, %v617
        %622 = vrot.lane.b32.xlu0 %v600, 64
        %v623 = vpop.permute.xlu0 %622
        %624 = vrot.lane.b32.xlu0 %v603, 64
        %v625 = vpop.permute.xlu0 %624
        %v628 = vmul.f32 %v618, %v623
        %v629 = vmul.f32 %v619, %v625
        %v630 = vpack.c.bf16 %v629, %v628
        %s631 = smul.u32 %s32, 8
        %s632 = smul.addr %s631, 4
        %s633 = scalar_lea.vmem [#allocation11], %s632
        %v634 = vld [vmem:[%s633] sm:$0xf]
        %v635 = vld [vmem:[%s633 + $0x4] sm:$0xf]
        %v636 = vld [vmem:[%s633 + $0x8] sm:$0xf]
        %v637 = vld [vmem:[%s633 + $0xc] sm:$0xf]
        %v638 = vld [vmem:[%s633 + $0x10] sm:$0xf]
        %v639 = vld [vmem:[%s633 + $0x14] sm:$0xf]
        %v640 = vld [vmem:[%s633 + $0x18] sm:$0xf]
        %v641 = vld [vmem:[%s633 + $0x1c] sm:$0xf]
        %v650 = vunpack.c.l.b16 %v634
        %v651 = vunpack.c.l.b16 %v635
        %v652 = vunpack.c.l.b16 %v636
        %v653 = vunpack.c.l.b16 %v637
        %v654 = vunpack.c.l.b16 %v638
        %v655 = vunpack.c.l.b16 %v639
        %v656 = vunpack.c.l.b16 %v640
        %v657 = vunpack.c.l.b16 %v641
        %v658 = vpack.c.b16 %v651, %v650
        %v659 = vpack.c.b16 %v653, %v652
        %v660 = vpack.c.b16 %v655, %v654
        %v661 = vpack.c.b16 %v657, %v656
        %vm666 = vcmask 523264
        %v668 = vsel %vm666, %v630, 0
        %670 = vmatprep.subr.bf16.mxu0 0
        %671 = vmatpush1.bf16.msra.mxu0 %v658
        %672 = vmatprep.subr.bf16.mxu0 0
        %673 = vmatpush1.bf16.msra.mxu0 %v659
        %674 = vmatprep.subr.bf16.mxu0 0
        %675 = vmatpush1.bf16.msra.mxu0 %v660
        %676 = vmatprep.subr.bf16.mxu0 0
        %677 = vmatpush1.bf16.msra.mxu0 %v661
        %678 = vmatprep.subr.bf16.mxu0 0
        %679 = vmatpush1.bf16.msra.mxu0 0
        %680 = vmatprep.subr.bf16.mxu0 0
        %681 = vmatpush1.bf16.msra.mxu0 0
        %682 = vmatprep.subr.bf16.mxu0 0
        %683 = vmatpush1.bf16.msra.mxu0 0
        %684 = vmatprep.subr.bf16.mxu0 0
        %685 = vmatpush1.bf16.msra.mxu0 0
        %686 = vmatprep.subr.bf16.mxu0 0
        %687 = vmatpush1.bf16.msra.mxu0 0
        %688 = vmatprep.subr.bf16.mxu0 0
        %689 = vmatpush1.bf16.msra.mxu0 0
        %690 = vmatprep.subr.bf16.mxu0 0
        %691 = vmatpush1.bf16.msra.mxu0 0
        %692 = vmatprep.subr.bf16.mxu0 0
        %693 = vmatpush1.bf16.msra.mxu0 0
        %694 = vmatprep.subr.bf16.mxu0 0
        %695 = vmatpush1.bf16.msra.mxu0 0
        %696 = vmatprep.subr.bf16.mxu0 0
        %697 = vmatpush1.bf16.msra.mxu0 0
        %698 = vmatprep.subr.bf16.mxu0 0
        %699 = vmatpush1.bf16.msra.mxu0 0
        %700 = vmatprep.subr.bf16.mxu0 0
        %701 = vmatpush1.bf16.msra.mxu0 0
        %702 = vmatprep.mubr.bf16.mxu0 0
        %703 = vmatmul.mubr.bf16.gmra.mrb[0].mxu0 %v668
        %v704 = vpop.f32.mrb[0].mxu0
        %v705 = vadd.f32 0.0, %v704
        %v706 = vpop.f32.mrb[0].mxu0
        %v707 = vpop.f32.mrb[0].mxu0
        %v708 = vadd.f32 0.0, %v707
        %v709 = vpop.f32.mrb[0].mxu0
        %710 = vdwg.mxu0
        // Predicated region
        $region81: #{tpu_custom_call.1} parent=47 // pred_check
          %p711 = pneg %p442
        $region82: #{tpu_custom_call.1} parent=47 // pred_check_branch
          %713 = sbr.rel (%p711) target = $region84
        $region83: #{tpu_custom_call.1} parent=47 // pred_region
          %714 = vst.msk [vmem:[#allocation3] sm:$0xff] %vm561, %v705
          %715 = vst.msk [vmem:[#allocation3 + $0x8] sm:$0xff] %vm561, %v708
        $region84: #{tpu_custom_call.1} parent=47 // pred_fallthru
          _
        %p716 = scmp.eq.s32.totalorder %s32, 1
        // Predicated region
        $region85: #{tpu_custom_call.1} parent=47 // pred_check
          %p717 = pneg %p716
        $region86: #{tpu_custom_call.1} parent=47 // pred_check_branch
          %719 = sbr.rel (%p717) target = $region88
        $region87: #{tpu_custom_call.1} parent=47 // pred_region
          %v720 = vld [vmem:[#allocation5] sm:$0xff]
          %v721 = vld [vmem:[#allocation5 + $0x8] sm:$0xff]
          %v722 = vld [vmem:[#allocation8] sm:$0xff]
          %v723 = vld [vmem:[#allocation8 + $0x8] sm:$0xff]
          %v724 = vld [vmem:[#allocation4] sm:$0xff]
          %v725 = vld [vmem:[#allocation4 + $0x8] sm:$0xff]
          %728 = vrot.lane.b32.xlu0 %v724, 127
          %v729 = vpop.permute.xlu0 %728
          %730 = vrot.lane.b32.xlu0 %v725, 127
          %v731 = vpop.permute.xlu0 %730
          %v734 = vmax.f32 %v724, %v729
          %v735 = vmax.f32 %v725, %v731
          %v736 = vsub.f32 %v724, %v734
          %v737 = vsub.f32 %v725, %v735
          %v738 = vmul.f32 %v736, 1.442695
          %v739 = vpow.pop %v738
          %v740 = vmul.f32 %v737, 1.442695
          %v741 = vpow.pop %v740
          %744 = vrot.lane.b32.xlu0 %v734, 1
          %v745 = vpop.permute.xlu0 %744
          %746 = vrot.lane.b32.xlu0 %v735, 1
          %v747 = vpop.permute.xlu0 %746
          %v750 = vsub.f32 %v724, %v745
          %v751 = vsub.f32 %v725, %v747
          %v752 = vmul.f32 %v750, 1.442695
          %v753 = vpow.pop %v752
          %v754 = vmul.f32 %v751, 1.442695
          %v755 = vpow.pop %v754
          %758 = vrot.lane.b32.xlu0 %v753, 127
          %v759 = vpop.permute.xlu0 %758
          %760 = vrot.lane.b32.xlu0 %v755, 127
          %v761 = vpop.permute.xlu0 %760
          %v764 = vadd.f32 %v739, %v759
          %v765 = vadd.f32 %v741, %v761
          %v766 = vrcp.pop %v764
          %v767 = vmul.f32 1.0, %v766
          %v768 = vrcp.pop %v765
          %v769 = vmul.f32 1.0, %v768
          %v770 = vmul.f32 %v739, %v767
          %v771 = vmul.f32 %v741, %v769
          %v772 = vld [vmem:[#allocation3] sm:$0xff]
          %v773 = vld [vmem:[#allocation3 + $0x8] sm:$0xff]
          %775 = vset.pattern.permute.xlu0 0
          %776 = vperm.xlu0 %775, %v770
          %v777 = vpop.permute.xlu0 %776
          %780 = vset.pattern.permute.xlu0 0
          %781 = vperm.xlu0 %780, %v771
          %v782 = vpop.permute.xlu0 %781
          %v784 = vmul.f32 %v777, %v772
          %v785 = vmul.f32 %v782, %v773
          %788 = vrot.lane.b32.xlu0 %v767, 1
          %v789 = vpop.permute.xlu0 %788
          %790 = vrot.lane.b32.xlu0 %v769, 1
          %v791 = vpop.permute.xlu0 %790
          %v794 = vmul.f32 %v753, %v789
          %v795 = vmul.f32 %v755, %v791
          %797 = vset.pattern.permute.xlu0 1
          %798 = vperm.xlu0 %797, %v794
          %v799 = vpop.permute.xlu0 %798
          %802 = vset.pattern.permute.xlu0 1
          %803 = vperm.xlu0 %802, %v795
          %v804 = vpop.permute.xlu0 %803
          %v806 = vmul.f32 %v799, %v705
          %v807 = vmul.f32 %v804, %v708
          %v808 = vadd.f32 %v784, %v806
          %v809 = vadd.f32 %v785, %v807
          %v810 = vadd.f32 %v720, %v808
          %v811 = vadd.f32 %v721, %v809
          %v812 = vsel %vm561, %v810, 0.0
          %813 = vadd.xlane.f32.xlu0 %v812
          %v814 = vpop.xlane.xlu0 %813
          %v815 = vsel %vm561, %v811, 0.0
          %816 = vadd.xlane.f32.xlu0 %v815
          %v817 = vpop.xlane.xlu0 %816
          %v818 = vmul.f32 %v814, 0.03125
          %v819 = vmul.f32 %v817, 0.03125
          %v820 = vmul.f32 %v810, %v810
          %v821 = vmul.f32 %v811, %v811
          %v822 = vsel %vm561, %v820, 0.0
          %823 = vadd.xlane.f32.xlu0 %v822
          %v824 = vpop.xlane.xlu0 %823
          %v825 = vsel %vm561, %v821, 0.0
          %826 = vadd.xlane.f32.xlu0 %v825
          %v827 = vpop.xlane.xlu0 %826
          %v828 = vmul.f32 %v824, 0.03125
          %v829 = vmul.f32 %v827, 0.03125
          %v830 = vmul.f32 %v818, %v818
          %v831 = vmul.f32 %v819, %v819
          %v832 = vsub.f32 %v828, %v830
          %v833 = vsub.f32 %v829, %v831
          %v834 = vmax.f32 %v832, 0.0
          %v835 = vmax.f32 %v833, 0.0
          %v836 = vsub.f32 %v810, %v818
          %v837 = vsub.f32 %v811, %v819
          %v838 = vadd.f32 %v834, 1e-05
          %v839 = vadd.f32 %v835, 1e-05
          %v840 = vrsqrt.pop %v838
          %v841 = vrsqrt.pop %v839
          %v842 = vmul.f32 %v836, %v840
          %v843 = vmul.f32 %v837, %v841
          %v844 = vld [vmem:[#allocation14] sm:$0x1]
          %v845 = vlaneseq
          %v846 = vshrl.u32 %v845, 7
          %v847 = vsub.s32 0, %v846
          %v848 = vrot.slane %v844, %v847
          %v849 = vmul.f32 %v842, %v848
          %v850 = vmul.f32 %v843, %v848
          %v851 = vld [vmem:[#allocation16] sm:$0x1]
          %v852 = vlaneseq
          %v853 = vshrl.u32 %v852, 7
          %v854 = vsub.s32 0, %v853
          %v855 = vrot.slane %v851, %v854
          %v856 = vadd.f32 %v849, %v855
          %v857 = vadd.f32 %v850, %v855
          %859 = vset.pattern.permute.xlu0 0
          %860 = vperm.xlu0 %859, %v722
          %v861 = vpop.permute.xlu0 %860
          %864 = vset.pattern.permute.xlu0 0
          %865 = vperm.xlu0 %864, %v723
          %v866 = vpop.permute.xlu0 %865
          %v868 = vmul.f32 %v856, %v861
          %v869 = vmul.f32 %v857, %v866
          %870 = vst.msk [vmem:[#allocation17] sm:$0xff] %vm561, %v868
          %871 = vst.msk [vmem:[#allocation17 + $0x8] sm:$0xff] %vm561, %v869
        $region88: #{tpu_custom_call.1} parent=47 // pred_fallthru
          _
        %p872 = scmp.eq.s32.totalorder %s32, 2
        // Predicated region
        $region89: #{tpu_custom_call.1} parent=47 // pred_check
          %p873 = pneg %p872
        $region90: #{tpu_custom_call.1} parent=47 // pred_check_branch
          %875 = sbr.rel (%p873) target = $region92
        $region91: #{tpu_custom_call.1} parent=47 // pred_region
          %v876 = vld [vmem:[#allocation5] sm:$0xff]
          %v877 = vld [vmem:[#allocation5 + $0x8] sm:$0xff]
          %v878 = vld [vmem:[#allocation8] sm:$0xff]
          %v879 = vld [vmem:[#allocation8 + $0x8] sm:$0xff]
          %v880 = vld [vmem:[#allocation4] sm:$0xff]
          %v881 = vld [vmem:[#allocation4 + $0x8] sm:$0xff]
          %884 = vrot.lane.b32.xlu0 %v880, 127
          %v885 = vpop.permute.xlu0 %884
          %886 = vrot.lane.b32.xlu0 %v881, 127
          %v887 = vpop.permute.xlu0 %886
          %v890 = vmax.f32 %v880, %v885
          %v891 = vmax.f32 %v881, %v887
          %v892 = vsub.f32 %v880, %v890
          %v893 = vsub.f32 %v881, %v891
          %v894 = vmul.f32 %v892, 1.442695
          %v895 = vpow.pop %v894
          %v896 = vmul.f32 %v893, 1.442695
          %v897 = vpow.pop %v896
          %900 = vrot.lane.b32.xlu0 %v890, 1
          %v901 = vpop.permute.xlu0 %900
          %902 = vrot.lane.b32.xlu0 %v891, 1
          %v903 = vpop.permute.xlu0 %902
          %v906 = vsub.f32 %v880, %v901
          %v907 = vsub.f32 %v881, %v903
          %v908 = vmul.f32 %v906, 1.442695
          %v909 = vpow.pop %v908
          %v910 = vmul.f32 %v907, 1.442695
          %v911 = vpow.pop %v910
          %914 = vrot.lane.b32.xlu0 %v909, 127
          %v915 = vpop.permute.xlu0 %914
          %916 = vrot.lane.b32.xlu0 %v911, 127
          %v917 = vpop.permute.xlu0 %916
          %v920 = vadd.f32 %v895, %v915
          %v921 = vadd.f32 %v897, %v917
          %v922 = vrcp.pop %v920
          %v923 = vmul.f32 1.0, %v922
          %v924 = vrcp.pop %v921
          %v925 = vmul.f32 1.0, %v924
          %v926 = vmul.f32 %v895, %v923
          %v927 = vmul.f32 %v897, %v925
          %v928 = vld [vmem:[#allocation3] sm:$0xff]
          %v929 = vld [vmem:[#allocation3 + $0x8] sm:$0xff]
          %931 = vset.pattern.permute.xlu0 2
          %932 = vperm.xlu0 %931, %v926
          %v933 = vpop.permute.xlu0 %932
          %936 = vset.pattern.permute.xlu0 2
          %937 = vperm.xlu0 %936, %v927
          %v938 = vpop.permute.xlu0 %937
          %v940 = vmul.f32 %v933, %v928
          %v941 = vmul.f32 %v938, %v929
          %944 = vrot.lane.b32.xlu0 %v923, 1
          %v945 = vpop.permute.xlu0 %944
          %946 = vrot.lane.b32.xlu0 %v925, 1
          %v947 = vpop.permute.xlu0 %946
          %v950 = vmul.f32 %v909, %v945
          %v951 = vmul.f32 %v911, %v947
          %953 = vset.pattern.permute.xlu0 3
          %954 = vperm.xlu0 %953, %v950
          %v955 = vpop.permute.xlu0 %954
          %958 = vset.pattern.permute.xlu0 3
          %959 = vperm.xlu0 %958, %v951
          %v960 = vpop.permute.xlu0 %959
          %v962 = vmul.f32 %v955, %v705
          %v963 = vmul.f32 %v960, %v708
          %v964 = vadd.f32 %v940, %v962
          %v965 = vadd.f32 %v941, %v963
          %v966 = vadd.f32 %v876, %v964
          %v967 = vadd.f32 %v877, %v965
          %v968 = vsel %vm561, %v966, 0.0
          %969 = vadd.xlane.f32.xlu0 %v968
          %v970 = vpop.xlane.xlu0 %969
          %v971 = vsel %vm561, %v967, 0.0
          %972 = vadd.xlane.f32.xlu0 %v971
          %v973 = vpop.xlane.xlu0 %972
          %v974 = vmul.f32 %v970, 0.03125
          %v975 = vmul.f32 %v973, 0.03125
          %v976 = vmul.f32 %v966, %v966
          %v977 = vmul.f32 %v967, %v967
          %v978 = vsel %vm561, %v976, 0.0
          %979 = vadd.xlane.f32.xlu0 %v978
          %v980 = vpop.xlane.xlu0 %979
          %v981 = vsel %vm561, %v977, 0.0
          %982 = vadd.xlane.f32.xlu0 %v981
          %v983 = vpop.xlane.xlu0 %982
          %v984 = vmul.f32 %v980, 0.03125
          %v985 = vmul.f32 %v983, 0.03125
          %v986 = vmul.f32 %v974, %v974
          %v987 = vmul.f32 %v975, %v975
          %v988 = vsub.f32 %v984, %v986
          %v989 = vsub.f32 %v985, %v987
          %v990 = vmax.f32 %v988, 0.0
          %v991 = vmax.f32 %v989, 0.0
          %v992 = vsub.f32 %v966, %v974
          %v993 = vsub.f32 %v967, %v975
          %v994 = vadd.f32 %v990, 1e-05
          %v995 = vadd.f32 %v991, 1e-05
          %v996 = vrsqrt.pop %v994
          %v997 = vrsqrt.pop %v995
          %v998 = vmul.f32 %v992, %v996
          %v999 = vmul.f32 %v993, %v997
          %v1000 = vld [vmem:[#allocation14 + $0x1] sm:$0x1]
          %v1001 = vlaneseq
          %v1002 = vshrl.u32 %v1001, 7
          %v1003 = vsub.s32 0, %v1002
          %v1004 = vrot.slane %v1000, %v1003
          %v1005 = vmul.f32 %v998, %v1004
          %v1006 = vmul.f32 %v999, %v1004
          %v1007 = vld [vmem:[#allocation16 + $0x1] sm:$0x1]
          %v1008 = vlaneseq
          %v1009 = vshrl.u32 %v1008, 7
          %v1010 = vsub.s32 0, %v1009
          %v1011 = vrot.slane %v1007, %v1010
          %v1012 = vadd.f32 %v1005, %v1011
          %v1013 = vadd.f32 %v1006, %v1011
          %1015 = vset.pattern.permute.xlu0 0
          %1016 = vperm.xlu0 %1015, %v878
          %v1017 = vpop.permute.xlu0 %1016
          %1020 = vset.pattern.permute.xlu0 0
          %1021 = vperm.xlu0 %1020, %v879
          %v1022 = vpop.permute.xlu0 %1021
          %v1024 = vmul.f32 %v1012, %v1017
          %v1025 = vmul.f32 %v1013, %v1022
          %1026 = vst.msk [vmem:[#allocation18] sm:$0xff] %vm561, %v1024
          %1027 = vst.msk [vmem:[#allocation18 + $0x8] sm:$0xff] %vm561, %v1025
        $region92: #{tpu_custom_call.1} parent=47 // pred_fallthru
          _
        %p1028 = scmp.eq.s32.totalorder %s32, 3
        // Predicated region
        $region93: #{tpu_custom_call.1} parent=47 // pred_check
          %p1029 = pneg %p1028
        $region94: #{tpu_custom_call.1} parent=47 // pred_check_branch
          %1031 = sbr.rel (%p1029) target = $region96
        $region95: #{tpu_custom_call.1} parent=47 // pred_region
          %v1032 = vld [vmem:[#allocation5] sm:$0xff]
          %v1033 = vld [vmem:[#allocation5 + $0x8] sm:$0xff]
          %v1034 = vld [vmem:[#allocation8] sm:$0xff]
          %v1035 = vld [vmem:[#allocation8 + $0x8] sm:$0xff]
          %v1036 = vld [vmem:[#allocation4] sm:$0xff]
          %v1037 = vld [vmem:[#allocation4 + $0x8] sm:$0xff]
          %1040 = vrot.lane.b32.xlu0 %v1036, 127
          %v1041 = vpop.permute.xlu0 %1040
          %1042 = vrot.lane.b32.xlu0 %v1037, 127
          %v1043 = vpop.permute.xlu0 %1042
          %v1046 = vmax.f32 %v1036, %v1041
          %v1047 = vmax.f32 %v1037, %v1043
          %v1048 = vsub.f32 %v1036, %v1046
          %v1049 = vsub.f32 %v1037, %v1047
          %v1050 = vmul.f32 %v1048, 1.442695
          %v1051 = vpow.pop %v1050
          %v1052 = vmul.f32 %v1049, 1.442695
          %v1053 = vpow.pop %v1052
          %1056 = vrot.lane.b32.xlu0 %v1046, 1
          %v1057 = vpop.permute.xlu0 %1056
          %1058 = vrot.lane.b32.xlu0 %v1047, 1
          %v1059 = vpop.permute.xlu0 %1058
          %v1062 = vsub.f32 %v1036, %v1057
          %v1063 = vsub.f32 %v1037, %v1059
          %v1064 = vmul.f32 %v1062, 1.442695
          %v1065 = vpow.pop %v1064
          %v1066 = vmul.f32 %v1063, 1.442695
          %v1067 = vpow.pop %v1066
          %1070 = vrot.lane.b32.xlu0 %v1065, 127
          %v1071 = vpop.permute.xlu0 %1070
          %1072 = vrot.lane.b32.xlu0 %v1067, 127
          %v1073 = vpop.permute.xlu0 %1072
          %v1076 = vadd.f32 %v1051, %v1071
          %v1077 = vadd.f32 %v1053, %v1073
          %v1078 = vrcp.pop %v1076
          %v1079 = vmul.f32 1.0, %v1078
          %v1080 = vrcp.pop %v1077
          %v1081 = vmul.f32 1.0, %v1080
          %v1082 = vmul.f32 %v1051, %v1079
          %v1083 = vmul.f32 %v1053, %v1081
          %v1084 = vld [vmem:[#allocation3] sm:$0xff]
          %v1085 = vld [vmem:[#allocation3 + $0x8] sm:$0xff]
          %1087 = vset.pattern.permute.xlu0 4
          %1088 = vperm.xlu0 %1087, %v1082
          %v1089 = vpop.permute.xlu0 %1088
          %1092 = vset.pattern.permute.xlu0 4
          %1093 = vperm.xlu0 %1092, %v1083
          %v1094 = vpop.permute.xlu0 %1093
          %v1096 = vmul.f32 %v1089, %v1084
          %v1097 = vmul.f32 %v1094, %v1085
          %1100 = vrot.lane.b32.xlu0 %v1079, 1
          %v1101 = vpop.permute.xlu0 %1100
          %1102 = vrot.lane.b32.xlu0 %v1081, 1
          %v1103 = vpop.permute.xlu0 %1102
          %v1106 = vmul.f32 %v1065, %v1101
          %v1107 = vmul.f32 %v1067, %v1103
          %1109 = vset.pattern.permute.xlu0 5
          %1110 = vperm.xlu0 %1109, %v1106
          %v1111 = vpop.permute.xlu0 %1110
          %1114 = vset.pattern.permute.xlu0 5
          %1115 = vperm.xlu0 %1114, %v1107
          %v1116 = vpop.permute.xlu0 %1115
          %v1118 = vmul.f32 %v1111, %v705
          %v1119 = vmul.f32 %v1116, %v708
          %v1120 = vadd.f32 %v1096, %v1118
          %v1121 = vadd.f32 %v1097, %v1119
          %v1122 = vadd.f32 %v1032, %v1120
          %v1123 = vadd.f32 %v1033, %v1121
          %v1124 = vsel %vm561, %v1122, 0.0
          %1125 = vadd.xlane.f32.xlu0 %v1124
          %v1126 = vpop.xlane.xlu0 %1125
          %v1127 = vsel %vm561, %v1123, 0.0
          %1128 = vadd.xlane.f32.xlu0 %v1127
          %v1129 = vpop.xlane.xlu0 %1128
          %v1130 = vmul.f32 %v1126, 0.03125
          %v1131 = vmul.f32 %v1129, 0.03125
          %v1132 = vmul.f32 %v1122, %v1122
          %v1133 = vmul.f32 %v1123, %v1123
          %v1134 = vsel %vm561, %v1132, 0.0
          %1135 = vadd.xlane.f32.xlu0 %v1134
          %v1136 = vpop.xlane.xlu0 %1135
          %v1137 = vsel %vm561, %v1133, 0.0
          %1138 = vadd.xlane.f32.xlu0 %v1137
          %v1139 = vpop.xlane.xlu0 %1138
          %v1140 = vmul.f32 %v1136, 0.03125
          %v1141 = vmul.f32 %v1139, 0.03125
          %v1142 = vmul.f32 %v1130, %v1130
          %v1143 = vmul.f32 %v1131, %v1131
          %v1144 = vsub.f32 %v1140, %v1142
          %v1145 = vsub.f32 %v1141, %v1143
          %v1146 = vmax.f32 %v1144, 0.0
          %v1147 = vmax.f32 %v1145, 0.0
          %v1148 = vsub.f32 %v1122, %v1130
          %v1149 = vsub.f32 %v1123, %v1131
          %v1150 = vadd.f32 %v1146, 1e-05
          %v1151 = vadd.f32 %v1147, 1e-05
          %v1152 = vrsqrt.pop %v1150
          %v1153 = vrsqrt.pop %v1151
          %v1154 = vmul.f32 %v1148, %v1152
          %v1155 = vmul.f32 %v1149, %v1153
          %v1156 = vld [vmem:[#allocation14 + $0x2] sm:$0x1]
          %v1157 = vlaneseq
          %v1158 = vshrl.u32 %v1157, 7
          %v1159 = vsub.s32 0, %v1158
          %v1160 = vrot.slane %v1156, %v1159
          %v1161 = vmul.f32 %v1154, %v1160
          %v1162 = vmul.f32 %v1155, %v1160
          %v1163 = vld [vmem:[#allocation16 + $0x2] sm:$0x1]
          %v1164 = vlaneseq
          %v1165 = vshrl.u32 %v1164, 7
          %v1166 = vsub.s32 0, %v1165
          %v1167 = vrot.slane %v1163, %v1166
          %v1168 = vadd.f32 %v1161, %v1167
          %v1169 = vadd.f32 %v1162, %v1167
          %1171 = vset.pattern.permute.xlu0 0
          %1172 = vperm.xlu0 %1171, %v1034
          %v1173 = vpop.permute.xlu0 %1172
          %1176 = vset.pattern.permute.xlu0 0
          %1177 = vperm.xlu0 %1176, %v1035
          %v1178 = vpop.permute.xlu0 %1177
          %v1180 = vmul.f32 %v1168, %v1173
          %v1181 = vmul.f32 %v1169, %v1178
          %1182 = vst.msk [vmem:[#allocation20] sm:$0xff] %vm561, %v1180
          %1183 = vst.msk [vmem:[#allocation20 + $0x8] sm:$0xff] %vm561, %v1181
        $region96: #{tpu_custom_call.1} parent=47 // pred_fallthru
          _
        // Predicated region
        $region97: #{tpu_custom_call.1} parent=47 // pred_check
          %p1184 = pneg %p214
        $region98: #{tpu_custom_call.1} parent=47 // pred_check_branch
          %1186 = sbr.rel (%p1184) target = $region100
        $region99: #{tpu_custom_call.1} parent=47 // pred_region
          %s1187 = smul.u32 2, %s31
          %s1189 = ssub.s32 256, 256
          %1190 = vsyncadd [#allocation7], %s1189
          %s1191 = smul.addr %s1187, 128
          %s1192 = scalar_lea.hbm %s7, %s1191
          %s1193 = sshll.u32 [#allocation17], 4
          %s1194 = int_to_ptr.vmem [resolvable:$true] %s1193
          %1199 = dma.vmem_to_hbm [thread:$0]  %s1194, 256, %s1192, [#allocation7], 128, 128, 8
        $region100: #{tpu_custom_call.1} parent=47 // pred_fallthru
          _
        // Predicated region
        $region101: #{tpu_custom_call.1} parent=47 // pred_check
          %p1200 = pneg %p240
        $region102: #{tpu_custom_call.1} parent=47 // pred_check_branch
          %1202 = sbr.rel (%p1200) target = $region104
        $region103: #{tpu_custom_call.1} parent=47 // pred_region
          %s1203 = smul.u32 2, %s31
          %s1205 = ssub.s32 256, 256
          %1206 = vsyncadd [#allocation19], %s1205
          %s1207 = smul.addr %s1203, 128
          %s1208 = scalar_lea.hbm %s8, %s1207
          %s1209 = sshll.u32 [#allocation18], 4
          %s1210 = int_to_ptr.vmem [resolvable:$true] %s1209
          %1215 = dma.vmem_to_hbm [thread:$0]  %s1210, 256, %s1208, [#allocation19], 128, 128, 8
        $region104: #{tpu_custom_call.1} parent=47 // pred_fallthru
          _
        // Predicated region
        $region105: #{tpu_custom_call.1} parent=47 // pred_check
          %p1216 = pneg %p266
        $region106: #{tpu_custom_call.1} parent=47 // pred_check_branch
          %1218 = sbr.rel (%p1216) target = $region108
        $region107: #{tpu_custom_call.1} parent=47 // pred_region
          %s1219 = smul.u32 2, %s31
          %s1221 = ssub.s32 256, 256
          %1222 = vsyncadd [#allocation19], %s1221
          %s1223 = smul.addr %s1219, 128
          %s1224 = scalar_lea.hbm %s9, %s1223
          %s1225 = sshll.u32 [#allocation20], 4
          %s1226 = int_to_ptr.vmem [resolvable:$true] %s1225
          %1231 = dma.vmem_to_hbm [thread:$0]  %s1226, 256, %s1224, [#allocation19], 128, 128, 8
        $region108: #{tpu_custom_call.1} parent=47 // pred_fallthru
          _
        // Predicated region
        $region109: #{tpu_custom_call.1} parent=47 // pred_check
          %p1232 = pneg %p214
        $region110: #{tpu_custom_call.1} parent=47 // pred_check_branch
          %1234 = sbr.rel (%p1232) target = $region112
        $region111: #{tpu_custom_call.1} parent=47 // pred_region
          %1235 = dma.done [#allocation7], 256
        $region112: #{tpu_custom_call.1} parent=47 // pred_fallthru
          _
        // Predicated region
        $region113: #{tpu_custom_call.1} parent=47 // pred_check
          %p1236 = pneg %p240
        $region114: #{tpu_custom_call.1} parent=47 // pred_check_branch
          %1238 = sbr.rel (%p1236) target = $region116
        $region115: #{tpu_custom_call.1} parent=47 // pred_region
          %1239 = dma.done [#allocation19], 256
        $region116: #{tpu_custom_call.1} parent=47 // pred_fallthru
          _
        // Predicated region
        $region117: #{tpu_custom_call.1} parent=47 // pred_check
          %p1240 = pneg %p266
        $region118: #{tpu_custom_call.1} parent=47 // pred_check_branch
          %1242 = sbr.rel (%p1240) target = $region120
        $region119: #{tpu_custom_call.1} parent=47 // pred_region
          %1243 = dma.done [#allocation19], 256
        $region120: #{tpu_custom_call.1} parent=47 // pred_fallthru
          _
      $region48: #{tpu_custom_call.1} parent=5 // pred_fallthru
        _
      %p1244 = scmp.le.s32.totalorder 2, %s22
      // Predicated region
      $region121: #{tpu_custom_call.1} parent=5 // pred_check
        %p1245 = pneg %p1244
      $region122: #{tpu_custom_call.1} parent=5 // pred_check_branch
        %1247 = sbr.rel (%p1245) target = $region124
      $region123: #{tpu_custom_call.1} parent=5 // pred_region
        %s1248 = ssub.s32 %s22, 2
      $region124: #{tpu_custom_call.1} parent=5 // pred_fallthru
        _
    $region6: #{tpu_custom_call.1} parent=1 // loop_footer
      %s26 = sadd.s32 1, %s22
    $region7: #{tpu_custom_call.1} parent=1 // loop_footer_branch
      %21 = sbr.rel target = $region3
    $region8: #{tpu_custom_call.1} parent=1 // loop_exit
      _
    %1249 = vsyncpa [#allocation6], 1
    %s1250 = scalar_lea.sflag [#allocation6], 1
    %1251 = vsyncpa %s1250, 1
    %1252 = vsyncpa [#allocation9], 1
    %1253 = vsyncpa [#allocation12], 1
    %1254 = vsyncpa [#allocation15], 1
    %1255 = vsyncpa [#allocation7], 1
    %s1256 = scalar_lea.sflag [#allocation7], 1
    %1257 = vsyncpa %s1256, 1
    %1258 = vsyncpa [#allocation19], 1

</llo_original>
